<compile_context>
chip_gen: v7x
topology: tpu7x:2x2x1
jax: 0.10.0
libtpu: 0.0.40
codegen_flags: <defaults>
</compile_context>

<pallas_src>
import math

import jax
import jax.numpy as jnp
from jax.experimental import pallas as pl
from jax.experimental.pallas import tpu as pltpu

# Toy shapes (original: S=1024, H=768, NH=12, E=384, vocab 50257).
B, S, H, NH, E, V = 2, 8, 32, 2, 16, 50
HD = H // NH          # true head dim (attention scale uses this)
HDP = 128             # per-head lane padding -> every head slice is vreg-aligned
FF = 4 * H
E_PAD = 128           # lane-dense output width; wrapper slices back to E
QKVW = NH * 3 * HDP   # fused, head-major, lane-padded QKV output width

# Packed "misc" parameter buffer: every entry starts on a 128-lane boundary.
LANE = 128
OFF_LN1_G, OFF_LN1_B = 0 * LANE, 1 * LANE
OFF_LN2_G, OFF_LN2_B = 2 * LANE, 3 * LANE
OFF_LNF_G, OFF_LNF_B = 4 * LANE, 5 * LANE
OFF_BO, OFF_B2 = 6 * LANE, 7 * LANE
OFF_B1, OFF_BTG = 8 * LANE, 9 * LANE
OFF_BQKV = 10 * LANE
MISC_P = OFF_BQKV + QKVW           # = 2048


def prompt_generator_kernel(h0_ref, misc_ref, wqkv_ref, wo_ref, w1_ref, w2_ref,
                            wtg_ref, out_ref):
    f32, bf16 = jnp.float32, jnp.bfloat16

    def ln(x, g_off, b_off):
        g = misc_ref[:, g_off:g_off + H]
        b = misc_ref[:, b_off:b_off + H]
        mu = jnp.mean(x, axis=-1, keepdims=True)
        var = jnp.mean(jnp.square(x - mu), axis=-1, keepdims=True)
        return (x - mu) * jax.lax.rsqrt(var + 1e-5) * g + b

    h = h0_ref[0]                                   # (S, H) f32 residual stream

    # --- pre-LN causal self-attention (heads stay in aligned 128-lane slots) ---
    x = ln(h, OFF_LN1_G, OFF_LN1_B).astype(bf16)
    qkv = (jnp.dot(x, wqkv_ref[...], preferred_element_type=f32)
           + misc_ref[:, OFF_BQKV:OFF_BQKV + QKVW])  # (S, NH*3*128) f32

    ri = jax.lax.broadcasted_iota(jnp.int32, (S, S), 0)
    ci = jax.lax.broadcasted_iota(jnp.int32, (S, S), 1)
    causal = ci <= ri
    scale = 1.0 / math.sqrt(HD)

    ctx_parts = []
    for hh in range(NH):                             # static unroll, no transposes
        off = hh * 3 * HDP
        q = qkv[:, off:off + HDP].astype(bf16)                    # (S, 128)
        k = qkv[:, off + HDP:off + 2 * HDP].astype(bf16)          # (S, 128)
        v = qkv[:, off + 2 * HDP:off + 3 * HDP].astype(bf16)      # (S, 128)
        # Padded lanes (>= HD) are exactly zero in q/k/v, so scores/ctx are exact.
        s = jnp.einsum("qd,kd->qk", q, k, preferred_element_type=f32) * scale
        s = jnp.where(causal, s, -1e30)
        s = s - jnp.max(s, axis=-1, keepdims=True)
        e = jnp.exp(s)
        p = e * pl.reciprocal(jnp.sum(e, axis=-1, keepdims=True), approx=True)
        ctx_parts.append(jnp.dot(p.astype(bf16), v, preferred_element_type=f32))
    ctx = jnp.concatenate(ctx_parts, axis=1).astype(bf16)          # (S, NH*128)
    attn = (jnp.dot(ctx, wo_ref[...], preferred_element_type=f32)
            + misc_ref[:, OFF_BO:OFF_BO + H])
    h = h + attn

    # --- pre-LN MLP ---
    x = ln(h, OFF_LN2_G, OFF_LN2_B).astype(bf16)
    m = jax.nn.gelu(
        jnp.dot(x, w1_ref[...], preferred_element_type=f32)
        + misc_ref[:, OFF_B1:OFF_B1 + FF],
        approximate=True)                            # GPT-2 "gelu_new", f32
    mlp = (jnp.dot(m.astype(bf16), w2_ref[...], preferred_element_type=f32)
           + misc_ref[:, OFF_B2:OFF_B2 + H])
    h = h + mlp

    # --- ln_f -> flatten . trim . generator, fused into W_tg (S, H, E_PAD) ---
    # Contraction over the flattened (S*H) axis is unrolled over S token rows so
    # no in-kernel (S,H)->(1,S*H) relayout reshape is needed.
    # TODO(synk): at real shapes this becomes a K-tiled grid reduction axis.
    hf = ln(h, OFF_LNF_G, OFF_LNF_B).astype(bf16)    # (S, H)
    acc = misc_ref[:, OFF_BTG:OFF_BTG + E_PAD]       # (1, E_PAD) f32 (fused bias)
    for s_i in range(S):
        acc = acc + jnp.dot(hf[s_i:s_i + 1, :], wtg_ref[s_i],
                            preferred_element_type=f32)
    out_ref[0] = acc                                 # (1, E_PAD), lane-dense


def fuse_params(params):
    """One-time wrapper-side weight fusion/repacking (hoisted out of forward)."""
    f32, bf16 = jnp.float32, jnp.bfloat16

    # Head-major, 128-lane-padded fused QKV weight/bias.
    wqkv = jnp.zeros((H, QKVW), f32)
    bqkv = jnp.zeros((1, QKVW), f32)
    for hh in range(NH):
        for c, nm in enumerate(("q", "k", "v")):
            off = (hh * 3 + c) * HDP
            wqkv = wqkv.at[:, off:off + HD].set(
                params["w" + nm][:, hh * HD:(hh + 1) * HD])
            bqkv = bqkv.at[:, off:off + HD].set(
                params["b" + nm][:, hh * HD:(hh + 1) * HD])

    # Output projection rows re-laid to match the padded head-major ctx layout.
    wo_pad = jnp.zeros((NH * HDP, H), f32)
    for hh in range(NH):
        wo_pad = wo_pad.at[hh * HDP:hh * HDP + HD, :].set(
            params["wo"][hh * HD:(hh + 1) * HD, :])

    # Algebraic fusion of trim and generator Linears, lane-padded to E_PAD.
    gen_w = jnp.pad(params["gen_w"], ((0, 0), (0, E_PAD - E)))     # (H, E_PAD)
    gen_b = jnp.pad(params["gen_b"], ((0, 0), (0, E_PAD - E)))     # (1, E_PAD)
    w_tg = jnp.dot(params["trim_w"], gen_w)                        # (S*H, E_PAD)
    b_tg = jnp.dot(params["trim_b"], gen_w) + gen_b                # (1, E_PAD)
    wtg3 = w_tg.reshape(S, H, E_PAD)                               # free host reshape

    # Pack all small vectors into one lane-aligned (1, MISC_P) buffer.
    misc = jnp.zeros((1, MISC_P), f32)
    def put(buf, off, val):
        return buf.at[:, off:off + val.shape[1]].set(val)
    misc = put(misc, OFF_LN1_G, params["ln1_g"]); misc = put(misc, OFF_LN1_B, params["ln1_b"])
    misc = put(misc, OFF_LN2_G, params["ln2_g"]); misc = put(misc, OFF_LN2_B, params["ln2_b"])
    misc = put(misc, OFF_LNF_G, params["lnf_g"]); misc = put(misc, OFF_LNF_B, params["lnf_b"])
    misc = put(misc, OFF_BO, params["bo"]);       misc = put(misc, OFF_B2, params["b2"])
    misc = put(misc, OFF_B1, params["b1"]);       misc = put(misc, OFF_BTG, b_tg)
    misc = put(misc, OFF_BQKV, bqkv)

    return {
        "wte": params["wte"], "wpe": params["wpe"],
        "misc": misc,                              # f32 (LN/bias math stays f32)
        "wqkv": wqkv.astype(bf16),                 # bf16 MXU weights
        "wo": wo_pad.astype(bf16),
        "w1": params["w1"].astype(bf16),
        "w2": params["w2"].astype(bf16),
        "wtg": wtg3.astype(bf16),
    }


def prompt_generator_forward(x_ids, fused):
    # Glue: token + positional embedding gather; everything else is in-kernel.
    h0 = (fused["wte"][x_ids] + fused["wpe"][None, :S, :]).astype(jnp.float32)
    ins = (h0, fused["misc"], fused["wqkv"], fused["wo"],
           fused["w1"], fused["w2"], fused["wtg"])
    out_pad = pl.pallas_call(
        prompt_generator_kernel,
        grid=(B,),
        in_specs=[
            pl.BlockSpec((1, S, H), lambda b: (b, 0, 0)),
            pl.BlockSpec((1, MISC_P), lambda b: (0, 0)),
            pl.BlockSpec((H, QKVW), lambda b: (0, 0)),
            pl.BlockSpec((NH * HDP, H), lambda b: (0, 0)),
            pl.BlockSpec((H, FF), lambda b: (0, 0)),
            pl.BlockSpec((FF, H), lambda b: (0, 0)),
            pl.BlockSpec((S, H, E_PAD), lambda b: (0, 0, 0)),
        ],
        out_specs=pl.BlockSpec((1, 1, E_PAD), lambda b: (b, 0, 0)),
        out_shape=jax.ShapeDtypeStruct((B, 1, E_PAD), jnp.float32),
        compiler_params=pltpu.CompilerParams(dimension_semantics=("parallel",)),
    )(*ins)
    return out_pad[:, 0, :E]


def init_params(key):
    ks = jax.random.split(key, 10)

    def nrm(k, shape):
        return (0.02 * jax.random.normal(k, shape)).astype(jnp.float32)

    ones = lambda s: jnp.ones(s, jnp.float32)
    zeros = lambda s: jnp.zeros(s, jnp.float32)
    return {
        "wte": nrm(ks[0], (V, H)),
        "wpe": nrm(ks[1], (S, H)),
        "ln1_g": ones((1, H)), "ln1_b": zeros((1, H)),
        "wq": nrm(ks[2], (H, H)), "bq": zeros((1, H)),
        "wk": nrm(ks[3], (H, H)), "bk": zeros((1, H)),
        "wv": nrm(ks[4], (H, H)), "bv": zeros((1, H)),
        "wo": nrm(ks[5], (H, H)), "bo": zeros((1, H)),
        "ln2_g": ones((1, H)), "ln2_b": zeros((1, H)),
        "w1": nrm(ks[6], (H, FF)), "b1": zeros((1, FF)),
        "w2": nrm(ks[7], (FF, H)), "b2": zeros((1, H)),
        "lnf_g": ones((1, H)), "lnf_b": zeros((1, H)),
        "trim_w": nrm(ks[8], (S * H, H)), "trim_b": zeros((1, H)),
        "gen_w": nrm(ks[9], (H, E)), "gen_b": zeros((1, E)),
    }


if __name__ == "__main__":
    key = jax.random.PRNGKey(0)
    pkey, xkey = jax.random.split(key)
    params = init_params(pkey)
    fused = fuse_params(params)   # hoisted: computed once, not per forward call

    # x.unsqueeze(1).repeat(1, 1, 1) in the torch code is a shape no-op that the
    # later .squeeze() calls undo, so the kernel consumes (B, S) token ids directly.
    x = jax.random.randint(xkey, (B, S), 0, V, dtype=jnp.int32)

    fwd = jax.jit(prompt_generator_forward)
    out = jax.block_until_ready(fwd(x, fused))
    assert out.shape == (B, E) and out.dtype == jnp.float32
    assert bool(jnp.all(jnp.isfinite(out)))
    print("KERNEL_OK")
</pallas_src>

<mosaic_0001>
module attributes {stable_mosaic.version = 11 : i64} {
  func.func @prompt_generator_kernel(%arg0: i32, %arg1: memref<1x8x32xf32, #tpu.memory_space<vmem>>, %arg2: memref<1x2048xf32, #tpu.memory_space<vmem>>, %arg3: memref<32x768xbf16, #tpu.memory_space<vmem>>, %arg4: memref<256x32xbf16, #tpu.memory_space<vmem>>, %arg5: memref<32x128xbf16, #tpu.memory_space<vmem>>, %arg6: memref<128x32xbf16, #tpu.memory_space<vmem>>, %arg7: memref<8x32x128xbf16, #tpu.memory_space<vmem>>, %arg8: memref<1x1x128xf32, #tpu.memory_space<vmem>>) attributes {dimension_semantics = [#tpu.dimension_semantics<parallel>], iteration_bounds = array<i64: 2>, scalar_prefetch = 0 : i64, scratch_operands = 0 : i64, tpu.core_type = #tpu.core_type<tc>, window_params = [{transform_indices = @transform_0, window_bounds = array<i64: 1, 8, 32>}, {pipeline_mode = #tpu.pipeline_mode<synchronous>, transform_indices = @transform_1, window_bounds = array<i64: 1, 2048>}, {pipeline_mode = #tpu.pipeline_mode<synchronous>, transform_indices = @transform_2, window_bounds = array<i64: 32, 768>}, {pipeline_mode = #tpu.pipeline_mode<synchronous>, transform_indices = @transform_3, window_bounds = array<i64: 256, 32>}, {pipeline_mode = #tpu.pipeline_mode<synchronous>, transform_indices = @transform_4, window_bounds = array<i64: 32, 128>}, {pipeline_mode = #tpu.pipeline_mode<synchronous>, transform_indices = @transform_5, window_bounds = array<i64: 128, 32>}, {pipeline_mode = #tpu.pipeline_mode<synchronous>, transform_indices = @transform_6, window_bounds = array<i64: 8, 32, 128>}, {transform_indices = @transform_7, window_bounds = array<i64: 1, 1, 128>}]} {
    %c0 = arith.constant 0 : index
    %c0_0 = arith.constant 0 : index
    %c0_1 = arith.constant 0 : index
    %0 = vector.load %arg1[%c0, %c0_0, %c0_1] : memref<1x8x32xf32, #tpu.memory_space<vmem>>, vector<1x8x32xf32>
    %1 = vector.shape_cast %0 : vector<1x8x32xf32> to vector<8x32xf32>
    %c0_2 = arith.constant 0 : index
    %c0_3 = arith.constant 0 : index
    %2 = vector.load %arg2[%c0_2, %c0_3] : memref<1x2048xf32, #tpu.memory_space<vmem>>, vector<1x32xf32>
    %c0_4 = arith.constant 0 : index
    %c128 = arith.constant 128 : index
    %3 = vector.load %arg2[%c0_4, %c128] : memref<1x2048xf32, #tpu.memory_space<vmem>>, vector<1x32xf32>
    %cst = arith.constant dense<0.000000e+00> : vector<8xf32>
    %4 = vector.multi_reduction <add>, %1, %cst [1] : vector<8x32xf32> to vector<8xf32>
    %5 = vector.shape_cast %4 : vector<8xf32> to vector<8x1xf32>
    %cst_5 = arith.constant 3.200000e+01 : f32
    %6 = vector.broadcast %cst_5 : f32 to vector<8x1xf32>
    %7 = arith.divf %5, %6 : vector<8x1xf32>
    %8 = vector.broadcast %7 : vector<8x1xf32> to vector<8x32xf32>
    %9 = arith.subf %1, %8 : vector<8x32xf32>
    %10 = arith.mulf %9, %9 : vector<8x32xf32>
    %cst_6 = arith.constant dense<0.000000e+00> : vector<8xf32>
    %11 = vector.multi_reduction <add>, %10, %cst_6 [1] : vector<8x32xf32> to vector<8xf32>
    %12 = vector.shape_cast %11 : vector<8xf32> to vector<8x1xf32>
    %cst_7 = arith.constant 3.200000e+01 : f32
    %13 = vector.broadcast %cst_7 : f32 to vector<8x1xf32>
    %14 = arith.divf %12, %13 : vector<8x1xf32>
    %15 = vector.broadcast %7 : vector<8x1xf32> to vector<8x32xf32>
    %16 = arith.subf %1, %15 : vector<8x32xf32>
    %cst_8 = arith.constant 9.99999974E-6 : f32
    %17 = vector.broadcast %cst_8 : f32 to vector<8x1xf32>
    %18 = arith.addf %14, %17 : vector<8x1xf32>
    %19 = math.rsqrt %18 : vector<8x1xf32>
    %20 = vector.broadcast %19 : vector<8x1xf32> to vector<8x32xf32>
    %21 = arith.mulf %16, %20 : vector<8x32xf32>
    %22 = vector.broadcast %2 : vector<1x32xf32> to vector<8x32xf32>
    %23 = arith.mulf %21, %22 : vector<8x32xf32>
    %24 = vector.broadcast %3 : vector<1x32xf32> to vector<8x32xf32>
    %25 = arith.addf %23, %24 : vector<8x32xf32>
    %26 = arith.truncf %25 : vector<8x32xf32> to vector<8x32xbf16>
    %c0_9 = arith.constant 0 : index
    %c0_10 = arith.constant 0 : index
    %27 = vector.load %arg3[%c0_9, %c0_10] : memref<32x768xbf16, #tpu.memory_space<vmem>>, vector<32x768xbf16>
    %cst_11 = arith.constant dense<0.000000e+00> : vector<8x768xf32>
    %28 = tpu.matmul %26, %27, %cst_11 {dimension_numbers = #tpu.dot_dimension_numbers<[1], [0], [0], [1], [0, 0, 1, 1], [], []>} : vector<8x32xbf16>, vector<32x768xbf16>, vector<8x768xf32> -> vector<8x768xf32>
    %c0_12 = arith.constant 0 : index
    %c1280 = arith.constant 1280 : index
    %29 = vector.load %arg2[%c0_12, %c1280] : memref<1x2048xf32, #tpu.memory_space<vmem>>, vector<1x768xf32>
    %30 = vector.broadcast %29 : vector<1x768xf32> to vector<8x768xf32>
    %31 = arith.addf %28, %30 : vector<8x768xf32>
    %32 = tpu.iota {dimensions = array<i32: 0>} : vector<8x8xi32>
    %33 = tpu.iota {dimensions = array<i32: 1>} : vector<8x8xi32>
    %34 = arith.cmpi sle, %33, %32 : vector<8x8xi32>
    %35 = vector.extract_strided_slice %31 {offsets = [0, 0], sizes = [8, 128], strides = [1, 1]} : vector<8x768xf32> to vector<8x128xf32>
    %36 = arith.truncf %35 : vector<8x128xf32> to vector<8x128xbf16>
    %37 = vector.extract_strided_slice %31 {offsets = [0, 128], sizes = [8, 128], strides = [1, 1]} : vector<8x768xf32> to vector<8x128xf32>
    %38 = arith.truncf %37 : vector<8x128xf32> to vector<8x128xbf16>
    %39 = vector.extract_strided_slice %31 {offsets = [0, 256], sizes = [8, 128], strides = [1, 1]} : vector<8x768xf32> to vector<8x128xf32>
    %40 = arith.truncf %39 : vector<8x128xf32> to vector<8x128xbf16>
    "tpu.trace_start"() <{level = 10 : i32, message = "qd,kd->qk"}> : () -> ()
    %cst_13 = arith.constant dense<0.000000e+00> : vector<8x8xf32>
    %41 = tpu.matmul %36, %38, %cst_13 {dimension_numbers = #tpu.dot_dimension_numbers<[1], [1], [0], [0], [0, 0, 1, 0], [], []>} : vector<8x128xbf16>, vector<8x128xbf16>, vector<8x8xf32> -> vector<8x8xf32>
    "tpu.trace_stop"() : () -> ()
    %cst_14 = arith.constant 2.500000e-01 : f32
    %42 = vector.broadcast %cst_14 : f32 to vector<8x8xf32>
    %43 = arith.mulf %41, %42 : vector<8x8xf32>
    %cst_15 = arith.constant -1.000000e+30 : f32
    %44 = vector.broadcast %cst_15 : f32 to vector<8x8xf32>
    %45 = arith.select %34, %43, %44 : vector<8x8xi1>, vector<8x8xf32>
    %cst_16 = arith.constant dense<0xFF800000> : vector<8xf32>
    %46 = vector.multi_reduction <maximumf>, %45, %cst_16 [1] : vector<8x8xf32> to vector<8xf32>
    %47 = vector.shape_cast %46 : vector<8xf32> to vector<8x1xf32>
    %48 = vector.broadcast %47 : vector<8x1xf32> to vector<8x8xf32>
    %49 = arith.subf %45, %48 : vector<8x8xf32>
    %50 = math.exp %49 : vector<8x8xf32>
    %cst_17 = arith.constant dense<0.000000e+00> : vector<8xf32>
    %51 = vector.multi_reduction <add>, %50, %cst_17 [1] : vector<8x8xf32> to vector<8xf32>
    %52 = vector.shape_cast %51 : vector<8xf32> to vector<8x1xf32>
    %53 = tpu.reciprocal %52 {approx = true} : vector<8x1xf32> -> vector<8x1xf32>
    %54 = vector.broadcast %53 : vector<8x1xf32> to vector<8x8xf32>
    %55 = arith.mulf %50, %54 : vector<8x8xf32>
    %56 = arith.truncf %55 : vector<8x8xf32> to vector<8x8xbf16>
    %cst_18 = arith.constant dense<0.000000e+00> : vector<8x128xf32>
    %57 = tpu.matmul %56, %40, %cst_18 {dimension_numbers = #tpu.dot_dimension_numbers<[1], [0], [0], [1], [0, 0, 1, 1], [], []>} : vector<8x8xbf16>, vector<8x128xbf16>, vector<8x128xf32> -> vector<8x128xf32>
    %58 = vector.extract_strided_slice %31 {offsets = [0, 384], sizes = [8, 128], strides = [1, 1]} : vector<8x768xf32> to vector<8x128xf32>
    %59 = arith.truncf %58 : vector<8x128xf32> to vector<8x128xbf16>
    %60 = vector.extract_strided_slice %31 {offsets = [0, 512], sizes = [8, 128], strides = [1, 1]} : vector<8x768xf32> to vector<8x128xf32>
    %61 = arith.truncf %60 : vector<8x128xf32> to vector<8x128xbf16>
    %62 = vector.extract_strided_slice %31 {offsets = [0, 640], sizes = [8, 128], strides = [1, 1]} : vector<8x768xf32> to vector<8x128xf32>
    %63 = arith.truncf %62 : vector<8x128xf32> to vector<8x128xbf16>
    "tpu.trace_start"() <{level = 10 : i32, message = "qd,kd->qk"}> : () -> ()
    %cst_19 = arith.constant dense<0.000000e+00> : vector<8x8xf32>
    %64 = tpu.matmul %59, %61, %cst_19 {dimension_numbers = #tpu.dot_dimension_numbers<[1], [1], [0], [0], [0, 0, 1, 0], [], []>} : vector<8x128xbf16>, vector<8x128xbf16>, vector<8x8xf32> -> vector<8x8xf32>
    "tpu.trace_stop"() : () -> ()
    %cst_20 = arith.constant 2.500000e-01 : f32
    %65 = vector.broadcast %cst_20 : f32 to vector<8x8xf32>
    %66 = arith.mulf %64, %65 : vector<8x8xf32>
    %cst_21 = arith.constant -1.000000e+30 : f32
    %67 = vector.broadcast %cst_21 : f32 to vector<8x8xf32>
    %68 = arith.select %34, %66, %67 : vector<8x8xi1>, vector<8x8xf32>
    %cst_22 = arith.constant dense<0xFF800000> : vector<8xf32>
    %69 = vector.multi_reduction <maximumf>, %68, %cst_22 [1] : vector<8x8xf32> to vector<8xf32>
    %70 = vector.shape_cast %69 : vector<8xf32> to vector<8x1xf32>
    %71 = vector.broadcast %70 : vector<8x1xf32> to vector<8x8xf32>
    %72 = arith.subf %68, %71 : vector<8x8xf32>
    %73 = math.exp %72 : vector<8x8xf32>
    %cst_23 = arith.constant dense<0.000000e+00> : vector<8xf32>
    %74 = vector.multi_reduction <add>, %73, %cst_23 [1] : vector<8x8xf32> to vector<8xf32>
    %75 = vector.shape_cast %74 : vector<8xf32> to vector<8x1xf32>
    %76 = tpu.reciprocal %75 {approx = true} : vector<8x1xf32> -> vector<8x1xf32>
    %77 = vector.broadcast %76 : vector<8x1xf32> to vector<8x8xf32>
    %78 = arith.mulf %73, %77 : vector<8x8xf32>
    %79 = arith.truncf %78 : vector<8x8xf32> to vector<8x8xbf16>
    %cst_24 = arith.constant dense<0.000000e+00> : vector<8x128xf32>
    %80 = tpu.matmul %79, %63, %cst_24 {dimension_numbers = #tpu.dot_dimension_numbers<[1], [0], [0], [1], [0, 0, 1, 1], [], []>} : vector<8x8xbf16>, vector<8x128xbf16>, vector<8x128xf32> -> vector<8x128xf32>
    %81 = tpu.concatenate %57, %80 in 1 : vector<8x128xf32>, vector<8x128xf32> -> vector<8x256xf32>
    %82 = arith.truncf %81 : vector<8x256xf32> to vector<8x256xbf16>
    %c0_25 = arith.constant 0 : index
    %c0_26 = arith.constant 0 : index
    %83 = vector.load %arg4[%c0_25, %c0_26] : memref<256x32xbf16, #tpu.memory_space<vmem>>, vector<256x32xbf16>
    %cst_27 = arith.constant dense<0.000000e+00> : vector<8x32xf32>
    %84 = tpu.matmul %82, %83, %cst_27 {dimension_numbers = #tpu.dot_dimension_numbers<[1], [0], [0], [1], [0, 0, 1, 1], [], []>} : vector<8x256xbf16>, vector<256x32xbf16>, vector<8x32xf32> -> vector<8x32xf32>
    %c0_28 = arith.constant 0 : index
    %c768 = arith.constant 768 : index
    %85 = vector.load %arg2[%c0_28, %c768] : memref<1x2048xf32, #tpu.memory_space<vmem>>, vector<1x32xf32>
    %86 = vector.broadcast %85 : vector<1x32xf32> to vector<8x32xf32>
    %87 = arith.addf %84, %86 : vector<8x32xf32>
    %88 = arith.addf %1, %87 : vector<8x32xf32>
    %c0_29 = arith.constant 0 : index
    %c256 = arith.constant 256 : index
    %89 = vector.load %arg2[%c0_29, %c256] : memref<1x2048xf32, #tpu.memory_space<vmem>>, vector<1x32xf32>
    %c0_30 = arith.constant 0 : index
    %c384 = arith.constant 384 : index
    %90 = vector.load %arg2[%c0_30, %c384] : memref<1x2048xf32, #tpu.memory_space<vmem>>, vector<1x32xf32>
    %cst_31 = arith.constant dense<0.000000e+00> : vector<8xf32>
    %91 = vector.multi_reduction <add>, %88, %cst_31 [1] : vector<8x32xf32> to vector<8xf32>
    %92 = vector.shape_cast %91 : vector<8xf32> to vector<8x1xf32>
    %cst_32 = arith.constant 3.200000e+01 : f32
    %93 = vector.broadcast %cst_32 : f32 to vector<8x1xf32>
    %94 = arith.divf %92, %93 : vector<8x1xf32>
    %95 = vector.broadcast %94 : vector<8x1xf32> to vector<8x32xf32>
    %96 = arith.subf %88, %95 : vector<8x32xf32>
    %97 = arith.mulf %96, %96 : vector<8x32xf32>
    %cst_33 = arith.constant dense<0.000000e+00> : vector<8xf32>
    %98 = vector.multi_reduction <add>, %97, %cst_33 [1] : vector<8x32xf32> to vector<8xf32>
    %99 = vector.shape_cast %98 : vector<8xf32> to vector<8x1xf32>
    %cst_34 = arith.constant 3.200000e+01 : f32
    %100 = vector.broadcast %cst_34 : f32 to vector<8x1xf32>
    %101 = arith.divf %99, %100 : vector<8x1xf32>
    %102 = vector.broadcast %94 : vector<8x1xf32> to vector<8x32xf32>
    %103 = arith.subf %88, %102 : vector<8x32xf32>
    %cst_35 = arith.constant 9.99999974E-6 : f32
    %104 = vector.broadcast %cst_35 : f32 to vector<8x1xf32>
    %105 = arith.addf %101, %104 : vector<8x1xf32>
    %106 = math.rsqrt %105 : vector<8x1xf32>
    %107 = vector.broadcast %106 : vector<8x1xf32> to vector<8x32xf32>
    %108 = arith.mulf %103, %107 : vector<8x32xf32>
    %109 = vector.broadcast %89 : vector<1x32xf32> to vector<8x32xf32>
    %110 = arith.mulf %108, %109 : vector<8x32xf32>
    %111 = vector.broadcast %90 : vector<1x32xf32> to vector<8x32xf32>
    %112 = arith.addf %110, %111 : vector<8x32xf32>
    %113 = arith.truncf %112 : vector<8x32xf32> to vector<8x32xbf16>
    %c0_36 = arith.constant 0 : index
    %c0_37 = arith.constant 0 : index
    %114 = vector.load %arg5[%c0_36, %c0_37] : memref<32x128xbf16, #tpu.memory_space<vmem>>, vector<32x128xbf16>
    %cst_38 = arith.constant dense<0.000000e+00> : vector<8x128xf32>
    %115 = tpu.matmul %113, %114, %cst_38 {dimension_numbers = #tpu.dot_dimension_numbers<[1], [0], [0], [1], [0, 0, 1, 1], [], []>} : vector<8x32xbf16>, vector<32x128xbf16>, vector<8x128xf32> -> vector<8x128xf32>
    %c0_39 = arith.constant 0 : index
    %c1024 = arith.constant 1024 : index
    %116 = vector.load %arg2[%c0_39, %c1024] : memref<1x2048xf32, #tpu.memory_space<vmem>>, vector<1x128xf32>
    %117 = vector.broadcast %116 : vector<1x128xf32> to vector<8x128xf32>
    %118 = arith.addf %115, %117 : vector<8x128xf32>
    %119 = arith.mulf %118, %118 : vector<8x128xf32>
    %120 = arith.mulf %118, %119 : vector<8x128xf32>
    %cst_40 = arith.constant 4.471500e-02 : f32
    %121 = vector.broadcast %cst_40 : f32 to vector<8x128xf32>
    %122 = arith.mulf %121, %120 : vector<8x128xf32>
    %123 = arith.addf %118, %122 : vector<8x128xf32>
    %cst_41 = arith.constant 0.797884583 : f32
    %124 = vector.broadcast %cst_41 : f32 to vector<8x128xf32>
    %125 = arith.mulf %124, %123 : vector<8x128xf32>
    %126 = math.tanh %125 : vector<8x128xf32>
    %cst_42 = arith.constant 1.000000e+00 : f32
    %127 = vector.broadcast %cst_42 : f32 to vector<8x128xf32>
    %128 = arith.addf %127, %126 : vector<8x128xf32>
    %cst_43 = arith.constant 5.000000e-01 : f32
    %129 = vector.broadcast %cst_43 : f32 to vector<8x128xf32>
    %130 = arith.mulf %129, %128 : vector<8x128xf32>
    %131 = arith.mulf %118, %130 : vector<8x128xf32>
    %132 = arith.truncf %131 : vector<8x128xf32> to vector<8x128xbf16>
    %c0_44 = arith.constant 0 : index
    %c0_45 = arith.constant 0 : index
    %133 = vector.load %arg6[%c0_44, %c0_45] : memref<128x32xbf16, #tpu.memory_space<vmem>>, vector<128x32xbf16>
    %cst_46 = arith.constant dense<0.000000e+00> : vector<8x32xf32>
    %134 = tpu.matmul %132, %133, %cst_46 {dimension_numbers = #tpu.dot_dimension_numbers<[1], [0], [0], [1], [0, 0, 1, 1], [], []>} : vector<8x128xbf16>, vector<128x32xbf16>, vector<8x32xf32> -> vector<8x32xf32>
    %c0_47 = arith.constant 0 : index
    %c896 = arith.constant 896 : index
    %135 = vector.load %arg2[%c0_47, %c896] : memref<1x2048xf32, #tpu.memory_space<vmem>>, vector<1x32xf32>
    %136 = vector.broadcast %135 : vector<1x32xf32> to vector<8x32xf32>
    %137 = arith.addf %134, %136 : vector<8x32xf32>
    %138 = arith.addf %88, %137 : vector<8x32xf32>
    %c0_48 = arith.constant 0 : index
    %c512 = arith.constant 512 : index
    %139 = vector.load %arg2[%c0_48, %c512] : memref<1x2048xf32, #tpu.memory_space<vmem>>, vector<1x32xf32>
    %c0_49 = arith.constant 0 : index
    %c640 = arith.constant 640 : index
    %140 = vector.load %arg2[%c0_49, %c640] : memref<1x2048xf32, #tpu.memory_space<vmem>>, vector<1x32xf32>
    %cst_50 = arith.constant dense<0.000000e+00> : vector<8xf32>
    %141 = vector.multi_reduction <add>, %138, %cst_50 [1] : vector<8x32xf32> to vector<8xf32>
    %142 = vector.shape_cast %141 : vector<8xf32> to vector<8x1xf32>
    %cst_51 = arith.constant 3.200000e+01 : f32
    %143 = vector.broadcast %cst_51 : f32 to vector<8x1xf32>
    %144 = arith.divf %142, %143 : vector<8x1xf32>
    %145 = vector.broadcast %144 : vector<8x1xf32> to vector<8x32xf32>
    %146 = arith.subf %138, %145 : vector<8x32xf32>
    %147 = arith.mulf %146, %146 : vector<8x32xf32>
    %cst_52 = arith.constant dense<0.000000e+00> : vector<8xf32>
    %148 = vector.multi_reduction <add>, %147, %cst_52 [1] : vector<8x32xf32> to vector<8xf32>
    %149 = vector.shape_cast %148 : vector<8xf32> to vector<8x1xf32>
    %cst_53 = arith.constant 3.200000e+01 : f32
    %150 = vector.broadcast %cst_53 : f32 to vector<8x1xf32>
    %151 = arith.divf %149, %150 : vector<8x1xf32>
    %152 = vector.broadcast %144 : vector<8x1xf32> to vector<8x32xf32>
    %153 = arith.subf %138, %152 : vector<8x32xf32>
    %cst_54 = arith.constant 9.99999974E-6 : f32
    %154 = vector.broadcast %cst_54 : f32 to vector<8x1xf32>
    %155 = arith.addf %151, %154 : vector<8x1xf32>
    %156 = math.rsqrt %155 : vector<8x1xf32>
    %157 = vector.broadcast %156 : vector<8x1xf32> to vector<8x32xf32>
    %158 = arith.mulf %153, %157 : vector<8x32xf32>
    %159 = vector.broadcast %139 : vector<1x32xf32> to vector<8x32xf32>
    %160 = arith.mulf %158, %159 : vector<8x32xf32>
    %161 = vector.broadcast %140 : vector<1x32xf32> to vector<8x32xf32>
    %162 = arith.addf %160, %161 : vector<8x32xf32>
    %163 = arith.truncf %162 : vector<8x32xf32> to vector<8x32xbf16>
    %c0_55 = arith.constant 0 : index
    %c1152 = arith.constant 1152 : index
    %164 = vector.load %arg2[%c0_55, %c1152] : memref<1x2048xf32, #tpu.memory_space<vmem>>, vector<1x128xf32>
    %165 = vector.extract_strided_slice %163 {offsets = [0, 0], sizes = [1, 32], strides = [1, 1]} : vector<8x32xbf16> to vector<1x32xbf16>
    %c0_56 = arith.constant 0 : index
    %c0_57 = arith.constant 0 : index
    %c0_58 = arith.constant 0 : index
    %166 = vector.load %arg7[%c0_56, %c0_57, %c0_58] : memref<8x32x128xbf16, #tpu.memory_space<vmem>>, vector<1x32x128xbf16>
    %167 = vector.shape_cast %166 : vector<1x32x128xbf16> to vector<32x128xbf16>
    %cst_59 = arith.constant dense<0.000000e+00> : vector<1x128xf32>
    %168 = tpu.matmul %165, %167, %cst_59 {dimension_numbers = #tpu.dot_dimension_numbers<[1], [0], [0], [1], [0, 0, 1, 1], [], []>} : vector<1x32xbf16>, vector<32x128xbf16>, vector<1x128xf32> -> vector<1x128xf32>
    %169 = arith.addf %164, %168 : vector<1x128xf32>
    %170 = vector.extract_strided_slice %163 {offsets = [1, 0], sizes = [1, 32], strides = [1, 1]} : vector<8x32xbf16> to vector<1x32xbf16>
    %c1 = arith.constant 1 : index
    %c0_60 = arith.constant 0 : index
    %c0_61 = arith.constant 0 : index
    %171 = vector.load %arg7[%c1, %c0_60, %c0_61] : memref<8x32x128xbf16, #tpu.memory_space<vmem>>, vector<1x32x128xbf16>
    %172 = vector.shape_cast %171 : vector<1x32x128xbf16> to vector<32x128xbf16>
    %cst_62 = arith.constant dense<0.000000e+00> : vector<1x128xf32>
    %173 = tpu.matmul %170, %172, %cst_62 {dimension_numbers = #tpu.dot_dimension_numbers<[1], [0], [0], [1], [0, 0, 1, 1], [], []>} : vector<1x32xbf16>, vector<32x128xbf16>, vector<1x128xf32> -> vector<1x128xf32>
    %174 = arith.addf %169, %173 : vector<1x128xf32>
    %175 = vector.extract_strided_slice %163 {offsets = [2, 0], sizes = [1, 32], strides = [1, 1]} : vector<8x32xbf16> to vector<1x32xbf16>
    %c2 = arith.constant 2 : index
    %c0_63 = arith.constant 0 : index
    %c0_64 = arith.constant 0 : index
    %176 = vector.load %arg7[%c2, %c0_63, %c0_64] : memref<8x32x128xbf16, #tpu.memory_space<vmem>>, vector<1x32x128xbf16>
    %177 = vector.shape_cast %176 : vector<1x32x128xbf16> to vector<32x128xbf16>
    %cst_65 = arith.constant dense<0.000000e+00> : vector<1x128xf32>
    %178 = tpu.matmul %175, %177, %cst_65 {dimension_numbers = #tpu.dot_dimension_numbers<[1], [0], [0], [1], [0, 0, 1, 1], [], []>} : vector<1x32xbf16>, vector<32x128xbf16>, vector<1x128xf32> -> vector<1x128xf32>
    %179 = arith.addf %174, %178 : vector<1x128xf32>
    %180 = vector.extract_strided_slice %163 {offsets = [3, 0], sizes = [1, 32], strides = [1, 1]} : vector<8x32xbf16> to vector<1x32xbf16>
    %c3 = arith.constant 3 : index
    %c0_66 = arith.constant 0 : index
    %c0_67 = arith.constant 0 : index
    %181 = vector.load %arg7[%c3, %c0_66, %c0_67] : memref<8x32x128xbf16, #tpu.memory_space<vmem>>, vector<1x32x128xbf16>
    %182 = vector.shape_cast %181 : vector<1x32x128xbf16> to vector<32x128xbf16>
    %cst_68 = arith.constant dense<0.000000e+00> : vector<1x128xf32>
    %183 = tpu.matmul %180, %182, %cst_68 {dimension_numbers = #tpu.dot_dimension_numbers<[1], [0], [0], [1], [0, 0, 1, 1], [], []>} : vector<1x32xbf16>, vector<32x128xbf16>, vector<1x128xf32> -> vector<1x128xf32>
    %184 = arith.addf %179, %183 : vector<1x128xf32>
    %185 = vector.extract_strided_slice %163 {offsets = [4, 0], sizes = [1, 32], strides = [1, 1]} : vector<8x32xbf16> to vector<1x32xbf16>
    %c4 = arith.constant 4 : index
    %c0_69 = arith.constant 0 : index
    %c0_70 = arith.constant 0 : index
    %186 = vector.load %arg7[%c4, %c0_69, %c0_70] : memref<8x32x128xbf16, #tpu.memory_space<vmem>>, vector<1x32x128xbf16>
    %187 = vector.shape_cast %186 : vector<1x32x128xbf16> to vector<32x128xbf16>
    %cst_71 = arith.constant dense<0.000000e+00> : vector<1x128xf32>
    %188 = tpu.matmul %185, %187, %cst_71 {dimension_numbers = #tpu.dot_dimension_numbers<[1], [0], [0], [1], [0, 0, 1, 1], [], []>} : vector<1x32xbf16>, vector<32x128xbf16>, vector<1x128xf32> -> vector<1x128xf32>
    %189 = arith.addf %184, %188 : vector<1x128xf32>
    %190 = vector.extract_strided_slice %163 {offsets = [5, 0], sizes = [1, 32], strides = [1, 1]} : vector<8x32xbf16> to vector<1x32xbf16>
    %c5 = arith.constant 5 : index
    %c0_72 = arith.constant 0 : index
    %c0_73 = arith.constant 0 : index
    %191 = vector.load %arg7[%c5, %c0_72, %c0_73] : memref<8x32x128xbf16, #tpu.memory_space<vmem>>, vector<1x32x128xbf16>
    %192 = vector.shape_cast %191 : vector<1x32x128xbf16> to vector<32x128xbf16>
    %cst_74 = arith.constant dense<0.000000e+00> : vector<1x128xf32>
    %193 = tpu.matmul %190, %192, %cst_74 {dimension_numbers = #tpu.dot_dimension_numbers<[1], [0], [0], [1], [0, 0, 1, 1], [], []>} : vector<1x32xbf16>, vector<32x128xbf16>, vector<1x128xf32> -> vector<1x128xf32>
    %194 = arith.addf %189, %193 : vector<1x128xf32>
    %195 = vector.extract_strided_slice %163 {offsets = [6, 0], sizes = [1, 32], strides = [1, 1]} : vector<8x32xbf16> to vector<1x32xbf16>
    %c6 = arith.constant 6 : index
    %c0_75 = arith.constant 0 : index
    %c0_76 = arith.constant 0 : index
    %196 = vector.load %arg7[%c6, %c0_75, %c0_76] : memref<8x32x128xbf16, #tpu.memory_space<vmem>>, vector<1x32x128xbf16>
    %197 = vector.shape_cast %196 : vector<1x32x128xbf16> to vector<32x128xbf16>
    %cst_77 = arith.constant dense<0.000000e+00> : vector<1x128xf32>
    %198 = tpu.matmul %195, %197, %cst_77 {dimension_numbers = #tpu.dot_dimension_numbers<[1], [0], [0], [1], [0, 0, 1, 1], [], []>} : vector<1x32xbf16>, vector<32x128xbf16>, vector<1x128xf32> -> vector<1x128xf32>
    %199 = arith.addf %194, %198 : vector<1x128xf32>
    %200 = vector.extract_strided_slice %163 {offsets = [7, 0], sizes = [1, 32], strides = [1, 1]} : vector<8x32xbf16> to vector<1x32xbf16>
    %c7 = arith.constant 7 : index
    %c0_78 = arith.constant 0 : index
    %c0_79 = arith.constant 0 : index
    %201 = vector.load %arg7[%c7, %c0_78, %c0_79] : memref<8x32x128xbf16, #tpu.memory_space<vmem>>, vector<1x32x128xbf16>
    %202 = vector.shape_cast %201 : vector<1x32x128xbf16> to vector<32x128xbf16>
    %cst_80 = arith.constant dense<0.000000e+00> : vector<1x128xf32>
    %203 = tpu.matmul %200, %202, %cst_80 {dimension_numbers = #tpu.dot_dimension_numbers<[1], [0], [0], [1], [0, 0, 1, 1], [], []>} : vector<1x32xbf16>, vector<32x128xbf16>, vector<1x128xf32> -> vector<1x128xf32>
    %204 = arith.addf %199, %203 : vector<1x128xf32>
    %c0_81 = arith.constant 0 : index
    %c0_82 = arith.constant 0 : index
    %c0_83 = arith.constant 0 : index
    %205 = vector.load %arg8[%c0_81, %c0_82, %c0_83] : memref<1x1x128xf32, #tpu.memory_space<vmem>>, vector<1x1x128xf32>
    %206 = vector.shape_cast %205 : vector<1x1x128xf32> to vector<1x128xf32>
    %207 = vector.shape_cast %204 : vector<1x128xf32> to vector<1x1x128xf32>
    tpu.vector_store %arg8[%c0_81, %c0_82, %c0_83], %207 {strides = array<i32>} : memref<1x1x128xf32, #tpu.memory_space<vmem>>, vector<1x1x128xf32>,
    return
  }
  func.func @transform_0(%arg0: i32) -> (i32, i32, i32) {
    %c0_i32 = arith.constant 0 : i32
    %c0_i32_0 = arith.constant 0 : i32
    %c0_i32_1 = arith.constant 0 : i32
    return %arg0, %c0_i32, %c0_i32_0 : i32, i32, i32
  }
  func.func @transform_1(%arg0: i32) -> (i32, i32) {
    %c0_i32 = arith.constant 0 : i32
    %c0_i32_0 = arith.constant 0 : i32
    %c0_i32_1 = arith.constant 0 : i32
    return %c0_i32, %c0_i32_0 : i32, i32
  }
  func.func @transform_2(%arg0: i32) -> (i32, i32) {
    %c0_i32 = arith.constant 0 : i32
    %c0_i32_0 = arith.constant 0 : i32
    %c0_i32_1 = arith.constant 0 : i32
    return %c0_i32, %c0_i32_0 : i32, i32
  }
  func.func @transform_3(%arg0: i32) -> (i32, i32) {
    %c0_i32 = arith.constant 0 : i32
    %c0_i32_0 = arith.constant 0 : i32
    %c0_i32_1 = arith.constant 0 : i32
    return %c0_i32, %c0_i32_0 : i32, i32
  }
  func.func @transform_4(%arg0: i32) -> (i32, i32) {
    %c0_i32 = arith.constant 0 : i32
    %c0_i32_0 = arith.constant 0 : i32
    %c0_i32_1 = arith.constant 0 : i32
    return %c0_i32, %c0_i32_0 : i32, i32
  }
  func.func @transform_5(%arg0: i32) -> (i32, i32) {
    %c0_i32 = arith.constant 0 : i32
    %c0_i32_0 = arith.constant 0 : i32
    %c0_i32_1 = arith.constant 0 : i32
    return %c0_i32, %c0_i32_0 : i32, i32
  }
  func.func @transform_6(%arg0: i32) -> (i32, i32, i32) {
    %c0_i32 = arith.constant 0 : i32
    %c0_i32_0 = arith.constant 0 : i32
    %c0_i32_1 = arith.constant 0 : i32
    %c0_i32_2 = arith.constant 0 : i32
    return %c0_i32, %c0_i32_0, %c0_i32_1 : i32, i32, i32
  }
  func.func @transform_7(%arg0: i32) -> (i32, i32, i32) {
    %c0_i32 = arith.constant 0 : i32
    %c0_i32_0 = arith.constant 0 : i32
    %c0_i32_1 = arith.constant 0 : i32
    return %arg0, %c0_i32, %c0_i32_0 : i32, i32, i32
  }
}

</mosaic_0001>

<llo_original>
// kernel: prompt_generator_forward.1
$region0: #{prompt_generator_forward.1}
  #allocation0 [shape = 'u32[]', space=smem, size = 0x4, offset = 0x4, fixed_abs, tag = 'smem constant byte address 0x4 - core index']
  #allocation1 [shape = 'u32[144,128]{1,0:T(1,128)}', space=vmem, size = 0x12000, scoped, tag = 'internal scratch']
  %s0 = inlined_call_operand.vmem [shape: f32[2,8,32], index: 0, kind: input, shape index: {}]
  %s1 = inlined_call_operand.vmem [shape: f32[1,2048], index: 1, kind: input, shape index: {}]
  %s2 = inlined_call_operand.vmem [shape: bf16[32,768], index: 2, kind: input, shape index: {}]
  %s3 = inlined_call_operand.vmem [shape: bf16[256,32], index: 3, kind: input, shape index: {}]
  %s4 = inlined_call_operand.vmem [shape: bf16[32,128], index: 4, kind: input, shape index: {}]
  %s5 = inlined_call_operand.vmem [shape: bf16[128,32], index: 5, kind: input, shape index: {}]
  %s6 = inlined_call_operand.vmem [shape: bf16[8,32,128], index: 6, kind: input, shape index: {}]
  %s7 = inlined_call_operand.hbm [shape: f32[2,1,128], index: 7, kind: output, shape index: {}]
  %s8 = sld [smem:[#allocation0]]
  $region61: #{prompt_generator_forward.1} parent=0
    _
  %s10 = ssub.s32 1, %s8
  %s11 = scalar_select 0, %s10, %s8
  $region1: #{prompt_generator_forward.1} parent=0
    #allocation2 [shape = 'u8[1024]{0}', space=vmem, size = 0x400, scoped, tag = 'output window, operand 0']
    #allocation3 [shape = 's32[2]{0}', space=sflag, size = 0x8, scoped, tag = 'scoped memory for prompt_generator_forward.1']
    %12 = vsyncpa [#allocation3], 0
    %s13 = scalar_lea.sflag [#allocation3], 1
    %14 = vsyncpa %s13, 0
    loop: start=0, step=1, limit=4
    $region2: #{prompt_generator_forward.1} parent=1 // loop_pre_header
      _
    $region3: #{prompt_generator_forward.1} parent=1 // loop_header
      %s16 = sphi 0, %s20
      %p17 = scmp.ge.s32.totalorder %s16, 4
      %s26 = sphi 0, %s28
      %s29 = sphi 0, %s26
      %s30 = sphi 0, %s29
      %s46 = sphi 0, %s30
      %s50 = sphi 0, %s50
      %s52 = sphi 0, %s50
      %s53 = sphi 0, %s52
      %s67 = sphi 0, %s53
      %s71 = sphi 0, %s71
      %s73 = sphi 0, %s71
      %s74 = sphi 0, %s73
      %s88 = sphi 0, %s74
      %s92 = sphi 0, %s92
      %s94 = sphi 0, %s92
      %s95 = sphi 0, %s94
      %s109 = sphi 0, %s95
      %s113 = sphi 0, %s113
      %s115 = sphi 0, %s113
      %s116 = sphi 0, %s115
      %s130 = sphi 0, %s116
      %s134 = sphi 0, %s134
      %s136 = sphi 0, %s134
      %s137 = sphi 0, %s136
      %s151 = sphi 0, %s137
      %s155 = sphi 0, %s155
      %s157 = sphi 0, %s155
      %s158 = sphi 0, %s157
      %s172 = sphi 0, %s158
      %s178 = sphi 0, %s180
      %s181 = sphi 0, %s178
      %s182 = sphi 0, %s181
      %s198 = sphi 0, %s182
    $region4: #{prompt_generator_forward.1} parent=1 // loop_header_branch
      %19 = sbr.rel (%p17) target = $region8
    $region5: #{prompt_generator_forward.1} parent=1 // loop_body
      %s21 = ssub.s32 %s16, 1
      %s22 = ssub.s32 %s16, 2
      %s23 = sadd.s32 %s16, 1
      %s24 = ssub.s32 %s16, %s23
      %p25 = scmp.eq.s32.totalorder %s24, 0
      %s27 = sadd.s32 %s26, 1
      %s28 = scalar_select %p25, %s26, %s27
      %p31 = pneg %p25
      %p32 = scmp.eq.s32.totalorder %s16, 1
      %p33 = por %p31, %p32
      %p34 = scmp.ne.s32.totalorder %s26, %s29
      %p35 = scmp.eq.s32.totalorder %s16, 0
      %p36 = por %p34, %p35
      %p37 = scmp.ne.s32.totalorder %s26, %s29
      %p38 = scmp.eq.s32.totalorder %s21, 1
      %p39 = por %p37, %p38
      %p40 = scmp.ne.s32.totalorder %s29, %s30
      %p41 = scmp.eq.s32.totalorder %s21, 0
      %p42 = por %p40, %p41
      %p43 = scmp.ne.s32.totalorder %s29, %s30
      %p44 = scmp.eq.s32.totalorder %s22, 1
      %p45 = por %p43, %p44
      %p47 = scmp.ne.s32.totalorder %s30, %s46
      %p48 = scmp.eq.s32.totalorder %s22, 0
      %p49 = por %p47, %p48
      %s51 = sadd.s32 %s50, 1
      %p54 = scmp.eq.s32.totalorder %s16, 1
      %p55 = scmp.ne.s32.totalorder %s50, %s52
      %p56 = scmp.eq.s32.totalorder %s16, 0
      %p57 = por %p55, %p56
      %p58 = scmp.ne.s32.totalorder %s50, %s52
      %p59 = scmp.eq.s32.totalorder %s21, 1
      %p60 = por %p58, %p59
      %p61 = scmp.ne.s32.totalorder %s52, %s53
      %p62 = scmp.eq.s32.totalorder %s21, 0
      %p63 = por %p61, %p62
      %p64 = scmp.ne.s32.totalorder %s52, %s53
      %p65 = scmp.eq.s32.totalorder %s22, 1
      %p66 = por %p64, %p65
      %p68 = scmp.ne.s32.totalorder %s53, %s67
      %p69 = scmp.eq.s32.totalorder %s22, 0
      %p70 = por %p68, %p69
      %s72 = sadd.s32 %s71, 1
      %p75 = scmp.eq.s32.totalorder %s16, 1
      %p76 = scmp.ne.s32.totalorder %s71, %s73
      %p77 = scmp.eq.s32.totalorder %s16, 0
      %p78 = por %p76, %p77
      %p79 = scmp.ne.s32.totalorder %s71, %s73
      %p80 = scmp.eq.s32.totalorder %s21, 1
      %p81 = por %p79, %p80
      %p82 = scmp.ne.s32.totalorder %s73, %s74
      %p83 = scmp.eq.s32.totalorder %s21, 0
      %p84 = por %p82, %p83
      %p85 = scmp.ne.s32.totalorder %s73, %s74
      %p86 = scmp.eq.s32.totalorder %s22, 1
      %p87 = por %p85, %p86
      %p89 = scmp.ne.s32.totalorder %s74, %s88
      %p90 = scmp.eq.s32.totalorder %s22, 0
      %p91 = por %p89, %p90
      %s93 = sadd.s32 %s92, 1
      %p96 = scmp.eq.s32.totalorder %s16, 1
      %p97 = scmp.ne.s32.totalorder %s92, %s94
      %p98 = scmp.eq.s32.totalorder %s16, 0
      %p99 = por %p97, %p98
      %p100 = scmp.ne.s32.totalorder %s92, %s94
      %p101 = scmp.eq.s32.totalorder %s21, 1
      %p102 = por %p100, %p101
      %p103 = scmp.ne.s32.totalorder %s94, %s95
      %p104 = scmp.eq.s32.totalorder %s21, 0
      %p105 = por %p103, %p104
      %p106 = scmp.ne.s32.totalorder %s94, %s95
      %p107 = scmp.eq.s32.totalorder %s22, 1
      %p108 = por %p106, %p107
      %p110 = scmp.ne.s32.totalorder %s95, %s109
      %p111 = scmp.eq.s32.totalorder %s22, 0
      %p112 = por %p110, %p111
      %s114 = sadd.s32 %s113, 1
      %p117 = scmp.eq.s32.totalorder %s16, 1
      %p118 = scmp.ne.s32.totalorder %s113, %s115
      %p119 = scmp.eq.s32.totalorder %s16, 0
      %p120 = por %p118, %p119
      %p121 = scmp.ne.s32.totalorder %s113, %s115
      %p122 = scmp.eq.s32.totalorder %s21, 1
      %p123 = por %p121, %p122
      %p124 = scmp.ne.s32.totalorder %s115, %s116
      %p125 = scmp.eq.s32.totalorder %s21, 0
      %p126 = por %p124, %p125
      %p127 = scmp.ne.s32.totalorder %s115, %s116
      %p128 = scmp.eq.s32.totalorder %s22, 1
      %p129 = por %p127, %p128
      %p131 = scmp.ne.s32.totalorder %s116, %s130
      %p132 = scmp.eq.s32.totalorder %s22, 0
      %p133 = por %p131, %p132
      %s135 = sadd.s32 %s134, 1
      %p138 = scmp.eq.s32.totalorder %s16, 1
      %p139 = scmp.ne.s32.totalorder %s134, %s136
      %p140 = scmp.eq.s32.totalorder %s16, 0
      %p141 = por %p139, %p140
      %p142 = scmp.ne.s32.totalorder %s134, %s136
      %p143 = scmp.eq.s32.totalorder %s21, 1
      %p144 = por %p142, %p143
      %p145 = scmp.ne.s32.totalorder %s136, %s137
      %p146 = scmp.eq.s32.totalorder %s21, 0
      %p147 = por %p145, %p146
      %p148 = scmp.ne.s32.totalorder %s136, %s137
      %p149 = scmp.eq.s32.totalorder %s22, 1
      %p150 = por %p148, %p149
      %p152 = scmp.ne.s32.totalorder %s137, %s151
      %p153 = scmp.eq.s32.totalorder %s22, 0
      %p154 = por %p152, %p153
      %s156 = sadd.s32 %s155, 1
      %p159 = scmp.eq.s32.totalorder %s16, 1
      %p160 = scmp.ne.s32.totalorder %s155, %s157
      %p161 = scmp.eq.s32.totalorder %s16, 0
      %p162 = por %p160, %p161
      %p163 = scmp.ne.s32.totalorder %s155, %s157
      %p164 = scmp.eq.s32.totalorder %s21, 1
      %p165 = por %p163, %p164
      %p166 = scmp.ne.s32.totalorder %s157, %s158
      %p167 = scmp.eq.s32.totalorder %s21, 0
      %p168 = por %p166, %p167
      %p169 = scmp.ne.s32.totalorder %s157, %s158
      %p170 = scmp.eq.s32.totalorder %s22, 1
      %p171 = por %p169, %p170
      %p173 = scmp.ne.s32.totalorder %s158, %s172
      %p174 = scmp.eq.s32.totalorder %s22, 0
      %p175 = por %p173, %p174
      %s176 = ssub.s32 %s16, %s23
      %p177 = scmp.eq.s32.totalorder %s176, 0
      %s179 = sadd.s32 %s178, 1
      %s180 = scalar_select %p177, %s178, %s179
      %p183 = pneg %p177
      %p184 = scmp.eq.s32.totalorder %s16, 1
      %p185 = por %p183, %p184
      %p186 = scmp.ne.s32.totalorder %s178, %s181
      %p187 = scmp.eq.s32.totalorder %s16, 0
      %p188 = por %p186, %p187
      %p189 = scmp.ne.s32.totalorder %s178, %s181
      %p190 = scmp.eq.s32.totalorder %s21, 1
      %p191 = por %p189, %p190
      %p192 = scmp.ne.s32.totalorder %s181, %s182
      %p193 = scmp.eq.s32.totalorder %s21, 0
      %p194 = por %p192, %p193
      %p195 = scmp.ne.s32.totalorder %s181, %s182
      %p196 = scmp.eq.s32.totalorder %s22, 1
      %p197 = por %p195, %p196
      %p199 = scmp.ne.s32.totalorder %s182, %s198
      %p200 = scmp.eq.s32.totalorder %s22, 0
      %p201 = por %p199, %p200
      %p202 = scmp.le.s32.totalorder 1, %s16
      %p203 = scmp.lt.s32.totalorder %s16, 3
      %p204 = pnand %p202, %p203
      %p205 = pneg %p204
      // Predicated region
      $region9: #{prompt_generator_forward.1} parent=5 // pred_check
        _
      $region10: #{prompt_generator_forward.1} parent=5 // pred_check_branch
        %207 = sbr.rel (%p204) target = $region12
      $region11: #{prompt_generator_forward.1} parent=5 // pred_region
        %s208 = ssub.s32 %s16, 1
        // Predicated region
        $region13: #{prompt_generator_forward.1} parent=11 // pred_check
          %p209 = pneg %p63
        $region14: #{prompt_generator_forward.1} parent=11 // pred_check_branch
          %211 = sbr.rel (%p209) target = $region16
        $region15: #{prompt_generator_forward.1} parent=11 // pred_region
          _
        $region16: #{prompt_generator_forward.1} parent=11 // pred_fallthru
          _
        // Predicated region
        $region17: #{prompt_generator_forward.1} parent=11 // pred_check
          %p212 = pneg %p84
        $region18: #{prompt_generator_forward.1} parent=11 // pred_check_branch
          %214 = sbr.rel (%p212) target = $region20
        $region19: #{prompt_generator_forward.1} parent=11 // pred_region
          _
        $region20: #{prompt_generator_forward.1} parent=11 // pred_fallthru
          _
        // Predicated region
        $region21: #{prompt_generator_forward.1} parent=11 // pred_check
          %p215 = pneg %p105
        $region22: #{prompt_generator_forward.1} parent=11 // pred_check_branch
          %217 = sbr.rel (%p215) target = $region24
        $region23: #{prompt_generator_forward.1} parent=11 // pred_region
          _
        $region24: #{prompt_generator_forward.1} parent=11 // pred_fallthru
          _
        // Predicated region
        $region25: #{prompt_generator_forward.1} parent=11 // pred_check
          %p218 = pneg %p126
        $region26: #{prompt_generator_forward.1} parent=11 // pred_check_branch
          %220 = sbr.rel (%p218) target = $region28
        $region27: #{prompt_generator_forward.1} parent=11 // pred_region
          _
        $region28: #{prompt_generator_forward.1} parent=11 // pred_fallthru
          _
        // Predicated region
        $region29: #{prompt_generator_forward.1} parent=11 // pred_check
          %p221 = pneg %p147
        $region30: #{prompt_generator_forward.1} parent=11 // pred_check_branch
          %223 = sbr.rel (%p221) target = $region32
        $region31: #{prompt_generator_forward.1} parent=11 // pred_region
          _
        $region32: #{prompt_generator_forward.1} parent=11 // pred_fallthru
          _
        // Predicated region
        $region33: #{prompt_generator_forward.1} parent=11 // pred_check
          %p224 = pneg %p168
        $region34: #{prompt_generator_forward.1} parent=11 // pred_check_branch
          %226 = sbr.rel (%p224) target = $region36
        $region35: #{prompt_generator_forward.1} parent=11 // pred_region
          _
        $region36: #{prompt_generator_forward.1} parent=11 // pred_fallthru
          _
      $region12: #{prompt_generator_forward.1} parent=5 // pred_fallthru
        _
      %p227 = scmp.lt.s32.totalorder %s16, 2
      // Predicated region
      $region37: #{prompt_generator_forward.1} parent=5 // pred_check
        %p228 = pneg %p227
      $region38: #{prompt_generator_forward.1} parent=5 // pred_check_branch
        %230 = sbr.rel (%p228) target = $region40
      $region39: #{prompt_generator_forward.1} parent=5 // pred_region
        // Predicated region
        $region41: #{prompt_generator_forward.1} parent=39 // pred_check
          %p231 = pneg %p36
        $region42: #{prompt_generator_forward.1} parent=39 // pred_check_branch
          %233 = sbr.rel (%p231) target = $region44
        $region43: #{prompt_generator_forward.1} parent=39 // pred_region
          %p234 = scmp.lt.s32.totalorder %s16, 1
          %s235 = scalar_select %p234, %s16, 1
          %s236 = smul.addr %s235, 8
          %s237 = scalar_lea.vmem %s0, %s236
        $region44: #{prompt_generator_forward.1} parent=39 // pred_fallthru
          _
      $region40: #{prompt_generator_forward.1} parent=5 // pred_fallthru
        _
      %p238 = scmp.le.s32.totalorder 1, %s16
      %p239 = scmp.lt.s32.totalorder %s16, 3
      %p240 = pnand %p238, %p239
      %p241 = pneg %p240
      // Predicated region
      $region45: #{prompt_generator_forward.1} parent=5 // pred_check
        _
      $region46: #{prompt_generator_forward.1} parent=5 // pred_check_branch
        %243 = sbr.rel (%p240) target = $region48
      $region47: #{prompt_generator_forward.1} parent=5 // pred_region
        %s244 = ssub.s32 %s16, 1
        %p245 = scmp.lt.s32.totalorder %s21, 1
        %s246 = scalar_select %p245, %s21, 1
        %s247 = smul.addr %s246, 8
        %s248 = scalar_lea.vmem %s0, %s247
        %p249 = pneg %p42
        %p250 = pneg %p39
        %p251 = pneg %p63
        %p252 = pneg %p60
        %p253 = pneg %p84
        %p254 = pneg %p81
        %p255 = pneg %p105
        %p256 = pneg %p102
        %p257 = pneg %p126
        %p258 = pneg %p123
        %p259 = pneg %p147
        %p260 = pneg %p144
        %p261 = pneg %p168
        %p262 = pneg %p165
        %p263 = pneg %p194
        %p264 = pneg %p191
        %s265 = sand.u32 %s181, 1
        %s266 = scalar_lea.sflag [#allocation3], %s265
        %s267 = sand.u32 %s181, 1
        %s268 = scalar_lea.vmem [#allocation2], %s267
        %p269 = scmp.lt.s32.totalorder %s21, 1
        %s270 = scalar_select %p269, %s21, 1
        %s271 = smul.addr %s270, 8
        %s272 = scalar_lea.vmem %s0, %s271
        %v274 = vld [vmem:[%s272] sm:$0xff]
        %v275 = vld [vmem:[%s1] sm:$0x1]
        %v276 = vld [vmem:[%s1 + $0x1] sm:$0x1]
        %vm277 = vcmask 261120
        %v278 = vsel %vm277, %v274, 0.0
        %279 = vadd.xlane.f32.xlu0 %v278
        %v280 = vpop.xlane.xlu0 %279
        %v281 = vrcp.pop 32.0
        %v282 = vmul.f32 %v280, %v281
        %v283 = vsub.f32 %v274, %v282
        %v284 = vmul.f32 %v283, %v283
        %v285 = vsel %vm277, %v284, 0.0
        %286 = vadd.xlane.f32.xlu0 %v285
        %v287 = vpop.xlane.xlu0 %286
        %v288 = vmul.f32 %v287, %v281
        %v289 = vadd.f32 %v288, 1e-05
        %v290 = vrsqrt.pop %v289
        %v291 = vmul.f32 %v283, %v290
        %v293 = vlaneseq
        %v294 = vshrl.u32 %v293, 7
        %v295 = vsub.s32 0, %v294
        %v296 = vrot.slane %v275, %v295
        %v298 = vmul.f32 %v291, %v296
        %v300 = vlaneseq
        %v301 = vshrl.u32 %v300, 7
        %v302 = vsub.s32 0, %v301
        %v303 = vrot.slane %v276, %v302
        %v305 = vadd.f32 %v298, %v303
        %v306 = vpack.c.bf16 %v305, %v305
        %v307 = vld [vmem:[%s2] sm:$0xff]
        %v308 = vld [vmem:[%s2 + $0x8] sm:$0xff]
        %v309 = vld [vmem:[%s2 + $0x10] sm:$0xff]
        %v310 = vld [vmem:[%s2 + $0x18] sm:$0xff]
        %v311 = vld [vmem:[%s2 + $0x20] sm:$0xff]
        %v312 = vld [vmem:[%s2 + $0x28] sm:$0xff]
        %v313 = vld [vmem:[%s2 + $0x30] sm:$0xff]
        %v314 = vld [vmem:[%s2 + $0x38] sm:$0xff]
        %v315 = vld [vmem:[%s2 + $0x40] sm:$0xff]
        %v316 = vld [vmem:[%s2 + $0x48] sm:$0xff]
        %v317 = vld [vmem:[%s2 + $0x50] sm:$0xff]
        %v318 = vld [vmem:[%s2 + $0x58] sm:$0xff]
        %v319 = vld [vmem:[%s1 + $0xa] sm:$0x3f]
        %v321 = vlaneseq
        %v322 = vshrl.u32 %v321, 7
        %v323 = vsub.s32 0, %v322
        %v324 = vrot.slane %v319, %v323
        %v325 = vlaneseq
        %v326 = vshrl.u32 %v325, 7
        %v327 = vsub.s32 1, %v326
        %v328 = vrot.slane %v319, %v327
        %v329 = vlaneseq
        %v330 = vshrl.u32 %v329, 7
        %v331 = vsub.s32 2, %v330
        %v332 = vrot.slane %v319, %v331
        %v333 = vlaneseq
        %v334 = vshrl.u32 %v333, 7
        %v335 = vsub.s32 3, %v334
        %v336 = vrot.slane %v319, %v335
        %v337 = vlaneseq
        %v338 = vshrl.u32 %v337, 7
        %v339 = vsub.s32 4, %v338
        %v340 = vrot.slane %v319, %v339
        %v341 = vlaneseq
        %v342 = vshrl.u32 %v341, 7
        %v343 = vsub.s32 5, %v342
        %v344 = vrot.slane %v319, %v343
        %v363 = vunpack.c.l.b16 %v307
        %v364 = vunpack.c.h.b16 %v307
        %v365 = vunpack.c.l.b16 %v308
        %v366 = vunpack.c.h.b16 %v308
        %v367 = vunpack.c.l.b16 %v309
        %v368 = vunpack.c.h.b16 %v309
        %v369 = vunpack.c.l.b16 %v310
        %v370 = vunpack.c.h.b16 %v310
        %v371 = vunpack.c.l.b16 %v311
        %v372 = vunpack.c.h.b16 %v311
        %v373 = vunpack.c.l.b16 %v312
        %v374 = vunpack.c.h.b16 %v312
        %v375 = vunpack.c.l.b16 %v313
        %v376 = vunpack.c.h.b16 %v313
        %v377 = vunpack.c.l.b16 %v314
        %v378 = vunpack.c.h.b16 %v314
        %v379 = vunpack.c.l.b16 %v315
        %v380 = vunpack.c.h.b16 %v315
        %v381 = vunpack.c.l.b16 %v316
        %v382 = vunpack.c.h.b16 %v316
        %v383 = vunpack.c.l.b16 %v317
        %v384 = vunpack.c.h.b16 %v317
        %v385 = vunpack.c.l.b16 %v318
        %v386 = vunpack.c.h.b16 %v318
        %v387 = vpack.c.b16 %v369, %v363
        %v388 = vpack.c.b16 %v370, %v364
        %v389 = vpack.c.b16 %v371, %v365
        %v390 = vpack.c.b16 %v372, %v366
        %v391 = vpack.c.b16 %v373, %v367
        %v392 = vpack.c.b16 %v374, %v368
        %v393 = vpack.c.b16 %v381, %v375
        %v394 = vpack.c.b16 %v382, %v376
        %v395 = vpack.c.b16 %v383, %v377
        %v396 = vpack.c.b16 %v384, %v378
        %v397 = vpack.c.b16 %v385, %v379
        %v398 = vpack.c.b16 %v386, %v380
        %v412 = vsel %vm277, %v306, 0
        %414 = vmatprep.subr.bf16.mxu0 %v388
        %415 = vmatpush1.bf16.msra.mxu0 %v387
        %416 = vmatprep.subr.bf16.mxu0 %v394
        %417 = vmatpush1.bf16.msra.mxu0 %v393
        %418 = vmatprep.subr.bf16.mxu0 0
        %419 = vmatpush1.bf16.msra.mxu0 0
        %420 = vmatprep.subr.bf16.mxu0 0
        %421 = vmatpush1.bf16.msra.mxu0 0
        %422 = vmatprep.subr.bf16.mxu0 0
        %423 = vmatpush1.bf16.msra.mxu0 0
        %424 = vmatprep.subr.bf16.mxu0 0
        %425 = vmatpush1.bf16.msra.mxu0 0
        %426 = vmatprep.subr.bf16.mxu0 0
        %427 = vmatpush1.bf16.msra.mxu0 0
        %428 = vmatprep.subr.bf16.mxu0 0
        %429 = vmatpush1.bf16.msra.mxu0 0
        %430 = vmatprep.subr.bf16.mxu0 0
        %431 = vmatpush1.bf16.msra.mxu0 0
        %432 = vmatprep.subr.bf16.mxu0 0
        %433 = vmatpush1.bf16.msra.mxu0 0
        %434 = vmatprep.subr.bf16.mxu0 0
        %435 = vmatpush1.bf16.msra.mxu0 0
        %436 = vmatprep.subr.bf16.mxu0 0
        %437 = vmatpush1.bf16.msra.mxu0 0
        %438 = vmatprep.subr.bf16.mxu0 0
        %439 = vmatpush1.bf16.msra.mxu0 0
        %440 = vmatprep.subr.bf16.mxu0 0
        %441 = vmatpush1.bf16.msra.mxu0 0
        %442 = vmatprep.subr.bf16.mxu0 0
        %443 = vmatpush1.bf16.msra.mxu0 0
        %444 = vmatprep.subr.bf16.mxu0 0
        %445 = vmatpush1.bf16.msra.mxu0 0
        %446 = vmatprep.mubr.bf16.mxu0 0
        %447 = vmatmul.mubr.bf16.gmra.mrb[0].mxu0 %v412
        %v448 = vpop.f32.mrb[0].mxu0
        %v449 = vadd.f32 %v324, %v448
        %v450 = vpop.f32.mrb[0].mxu0
        %v451 = vadd.f32 %v328, %v450
        %v452 = vpop.f32.mrb[0].mxu0
        %v453 = vpop.f32.mrb[0].mxu0
        %454 = vdwg.mxu0
        %455 = vmatprep.subr.bf16.mxu0 %v390
        %456 = vmatpush1.bf16.msra.mxu0 %v389
        %457 = vmatprep.subr.bf16.mxu0 %v396
        %458 = vmatpush1.bf16.msra.mxu0 %v395
        %459 = vmatprep.subr.bf16.mxu0 0
        %460 = vmatpush1.bf16.msra.mxu0 0
        %461 = vmatprep.subr.bf16.mxu0 0
        %462 = vmatpush1.bf16.msra.mxu0 0
        %463 = vmatprep.subr.bf16.mxu0 0
        %464 = vmatpush1.bf16.msra.mxu0 0
        %465 = vmatprep.subr.bf16.mxu0 0
        %466 = vmatpush1.bf16.msra.mxu0 0
        %467 = vmatprep.subr.bf16.mxu0 0
        %468 = vmatpush1.bf16.msra.mxu0 0
        %469 = vmatprep.subr.bf16.mxu0 0
        %470 = vmatpush1.bf16.msra.mxu0 0
        %471 = vmatprep.subr.bf16.mxu0 0
        %472 = vmatpush1.bf16.msra.mxu0 0
        %473 = vmatprep.subr.bf16.mxu0 0
        %474 = vmatpush1.bf16.msra.mxu0 0
        %475 = vmatprep.subr.bf16.mxu0 0
        %476 = vmatpush1.bf16.msra.mxu0 0
        %477 = vmatprep.subr.bf16.mxu0 0
        %478 = vmatpush1.bf16.msra.mxu0 0
        %479 = vmatprep.subr.bf16.mxu0 0
        %480 = vmatpush1.bf16.msra.mxu0 0
        %481 = vmatprep.subr.bf16.mxu0 0
        %482 = vmatpush1.bf16.msra.mxu0 0
        %483 = vmatprep.subr.bf16.mxu0 0
        %484 = vmatpush1.bf16.msra.mxu0 0
        %485 = vmatprep.subr.bf16.mxu0 0
        %486 = vmatpush1.bf16.msra.mxu0 0
        %487 = vmatprep.mubr.bf16.mxu0 0
        %488 = vmatmul.mubr.bf16.gmra.mrb[0].mxu0 %v412
        %v489 = vpop.f32.mrb[0].mxu0
        %v490 = vadd.f32 %v332, %v489
        %v491 = vpop.f32.mrb[0].mxu0
        %v492 = vadd.f32 %v336, %v491
        %v493 = vpop.f32.mrb[0].mxu0
        %v494 = vpop.f32.mrb[0].mxu0
        %495 = vdwg.mxu0
        %496 = vmatprep.subr.bf16.mxu0 %v392
        %497 = vmatpush1.bf16.msra.mxu0 %v391
        %498 = vmatprep.subr.bf16.mxu0 %v398
        %499 = vmatpush1.bf16.msra.mxu0 %v397
        %500 = vmatprep.subr.bf16.mxu0 0
        %501 = vmatpush1.bf16.msra.mxu0 0
        %502 = vmatprep.subr.bf16.mxu0 0
        %503 = vmatpush1.bf16.msra.mxu0 0
        %504 = vmatprep.subr.bf16.mxu0 0
        %505 = vmatpush1.bf16.msra.mxu0 0
        %506 = vmatprep.subr.bf16.mxu0 0
        %507 = vmatpush1.bf16.msra.mxu0 0
        %508 = vmatprep.subr.bf16.mxu0 0
        %509 = vmatpush1.bf16.msra.mxu0 0
        %510 = vmatprep.subr.bf16.mxu0 0
        %511 = vmatpush1.bf16.msra.mxu0 0
        %512 = vmatprep.subr.bf16.mxu0 0
        %513 = vmatpush1.bf16.msra.mxu0 0
        %514 = vmatprep.subr.bf16.mxu0 0
        %515 = vmatpush1.bf16.msra.mxu0 0
        %516 = vmatprep.subr.bf16.mxu0 0
        %517 = vmatpush1.bf16.msra.mxu0 0
        %518 = vmatprep.subr.bf16.mxu0 0
        %519 = vmatpush1.bf16.msra.mxu0 0
        %520 = vmatprep.subr.bf16.mxu0 0
        %521 = vmatpush1.bf16.msra.mxu0 0
        %522 = vmatprep.subr.bf16.mxu0 0
        %523 = vmatpush1.bf16.msra.mxu0 0
        %524 = vmatprep.subr.bf16.mxu0 0
        %525 = vmatpush1.bf16.msra.mxu0 0
        %526 = vmatprep.subr.bf16.mxu0 0
        %527 = vmatpush1.bf16.msra.mxu0 0
        %528 = vmatprep.mubr.bf16.mxu0 0
        %529 = vmatmul.mubr.bf16.gmra.mrb[0].mxu0 %v412
        %v530 = vpop.f32.mrb[0].mxu0
        %v531 = vadd.f32 %v340, %v530
        %v532 = vpop.f32.mrb[0].mxu0
        %v533 = vadd.f32 %v344, %v532
        %v534 = vpop.f32.mrb[0].mxu0
        %v535 = vpop.f32.mrb[0].mxu0
        %536 = vdwg.mxu0
        %v537 = vlaneseq
        %v538 = vshrl.u32 %v537, 7
        %v539 = vlaneseq
        %v540 = vand.u32 %v539, 127
        %vm541 = vcmp.le.s32.totalorder %v540, %v538
        %v542 = vpack.c.bf16 %v449, %v449
        %v543 = vpack.c.bf16 %v451, %v451
        %v544 = vpack.c.bf16 %v490, %v490
        %545 = vmatprep.subr.bf16.mxu0 0
        %546 = vmatpush1.bf16.xpose.msra.mxu0 %v543
        %547 = vmatprep.subr.bf16.mxu0 0
        %548 = vmatpush1.bf16.xpose.msra.mxu0 0
        %549 = vmatprep.subr.bf16.mxu0 0
        %550 = vmatpush1.bf16.xpose.msra.mxu0 0
        %551 = vmatprep.subr.bf16.mxu0 0
        %552 = vmatpush1.bf16.xpose.msra.mxu0 0
        %553 = vmatprep.subr.bf16.mxu0 0
        %554 = vmatpush1.bf16.xpose.msra.mxu0 0
        %555 = vmatprep.subr.bf16.mxu0 0
        %556 = vmatpush1.bf16.xpose.msra.mxu0 0
        %557 = vmatprep.subr.bf16.mxu0 0
        %558 = vmatpush1.bf16.xpose.msra.mxu0 0
        %559 = vmatprep.subr.bf16.mxu0 0
        %560 = vmatpush1.bf16.xpose.msra.mxu0 0
        %561 = vmatprep.subr.bf16.mxu0 0
        %562 = vmatpush1.bf16.xpose.msra.mxu0 0
        %563 = vmatprep.subr.bf16.mxu0 0
        %564 = vmatpush1.bf16.xpose.msra.mxu0 0
        %565 = vmatprep.subr.bf16.mxu0 0
        %566 = vmatpush1.bf16.xpose.msra.mxu0 0
        %567 = vmatprep.subr.bf16.mxu0 0
        %568 = vmatpush1.bf16.xpose.msra.mxu0 0
        %569 = vmatprep.subr.bf16.mxu0 0
        %570 = vmatpush1.bf16.xpose.msra.mxu0 0
        %571 = vmatprep.subr.bf16.mxu0 0
        %572 = vmatpush1.bf16.xpose.msra.mxu0 0
        %573 = vmatprep.subr.bf16.mxu0 0
        %574 = vmatpush1.bf16.xpose.msra.mxu0 0
        %575 = vmatprep.subr.bf16.mxu0 0
        %576 = vmatpush1.bf16.xpose.msra.mxu0 0
        %577 = vmatprep.mubr.bf16.mxu0 0
        %578 = vmatmul.mubr.bf16.gmra.mrb[0].mxu0 %v542
        %v579 = vpop.f32.mrb[0].mxu0
        %v580 = vadd.f32 0.0, %v579
        %v581 = vpop.f32.mrb[0].mxu0
        %v582 = vpop.f32.mrb[0].mxu0
        %v583 = vpop.f32.mrb[0].mxu0
        %584 = vdwg.mxu0
        %v585 = vmul.f32 %v580, 0.25
        %v586 = vsel %vm541, %v585, -1e+30
        %vm587 = vcmask 64512
        %v588 = vsel %vm587, %v586, -inf
        %589 = vmax.xlane.f32.xlu0 %v588
        %v590 = vpop.xlane.xlu0 %589
        %v591 = vsub.f32 %v586, %v590
        %v592 = vmul.f32 %v591, 1.442695
        %v593 = vpow.pop %v592
        %v594 = vsel %vm587, %v593, 0.0
        %595 = vadd.xlane.f32.xlu0 %v594
        %v596 = vpop.xlane.xlu0 %595
        %v597 = vrcp.pop %v596
        %v598 = vmul.f32 %v593, %v597
        %v599 = vpack.c.bf16 %v598, %v598
        %v601 = vsel %vm587, %v599, 0
        %vm603 = vcmask 1043456
        %v605 = vsel %vm603, %v544, 0
        %607 = vmatprep.subr.bf16.mxu0 0
        %608 = vmatpush1.bf16.msra.mxu0 %v605
        %609 = vmatprep.subr.bf16.mxu0 0
        %610 = vmatpush1.bf16.msra.mxu0 0
        %611 = vmatprep.subr.bf16.mxu0 0
        %612 = vmatpush1.bf16.msra.mxu0 0
        %613 = vmatprep.subr.bf16.mxu0 0
        %614 = vmatpush1.bf16.msra.mxu0 0
        %615 = vmatprep.subr.bf16.mxu0 0
        %616 = vmatpush1.bf16.msra.mxu0 0
        %617 = vmatprep.subr.bf16.mxu0 0
        %618 = vmatpush1.bf16.msra.mxu0 0
        %619 = vmatprep.subr.bf16.mxu0 0
        %620 = vmatpush1.bf16.msra.mxu0 0
        %621 = vmatprep.subr.bf16.mxu0 0
        %622 = vmatpush1.bf16.msra.mxu0 0
        %623 = vmatprep.subr.bf16.mxu0 0
        %624 = vmatpush1.bf16.msra.mxu0 0
        %625 = vmatprep.subr.bf16.mxu0 0
        %626 = vmatpush1.bf16.msra.mxu0 0
        %627 = vmatprep.subr.bf16.mxu0 0
        %628 = vmatpush1.bf16.msra.mxu0 0
        %629 = vmatprep.subr.bf16.mxu0 0
        %630 = vmatpush1.bf16.msra.mxu0 0
        %631 = vmatprep.subr.bf16.mxu0 0
        %632 = vmatpush1.bf16.msra.mxu0 0
        %633 = vmatprep.subr.bf16.mxu0 0
        %634 = vmatpush1.bf16.msra.mxu0 0
        %635 = vmatprep.subr.bf16.mxu0 0
        %636 = vmatpush1.bf16.msra.mxu0 0
        %637 = vmatprep.subr.bf16.mxu0 0
        %638 = vmatpush1.bf16.msra.mxu0 0
        %639 = vmatprep.mubr.bf16.mxu0 0
        %640 = vmatmul.mubr.bf16.gmra.mrb[0].mxu0 %v601
        %v641 = vpop.f32.mrb[0].mxu0
        %v642 = vadd.f32 0.0, %v641
        %v643 = vpop.f32.mrb[0].mxu0
        %v644 = vpop.f32.mrb[0].mxu0
        %v645 = vpop.f32.mrb[0].mxu0
        %646 = vdwg.mxu0
        %v647 = vpack.c.bf16 %v492, %v492
        %v648 = vpack.c.bf16 %v531, %v531
        %v649 = vpack.c.bf16 %v533, %v533
        %650 = vmatprep.subr.bf16.mxu0 0
        %651 = vmatpush1.bf16.xpose.msra.mxu0 %v648
        %652 = vmatprep.subr.bf16.mxu0 0
        %653 = vmatpush1.bf16.xpose.msra.mxu0 0
        %654 = vmatprep.subr.bf16.mxu0 0
        %655 = vmatpush1.bf16.xpose.msra.mxu0 0
        %656 = vmatprep.subr.bf16.mxu0 0
        %657 = vmatpush1.bf16.xpose.msra.mxu0 0
        %658 = vmatprep.subr.bf16.mxu0 0
        %659 = vmatpush1.bf16.xpose.msra.mxu0 0
        %660 = vmatprep.subr.bf16.mxu0 0
        %661 = vmatpush1.bf16.xpose.msra.mxu0 0
        %662 = vmatprep.subr.bf16.mxu0 0
        %663 = vmatpush1.bf16.xpose.msra.mxu0 0
        %664 = vmatprep.subr.bf16.mxu0 0
        %665 = vmatpush1.bf16.xpose.msra.mxu0 0
        %666 = vmatprep.subr.bf16.mxu0 0
        %667 = vmatpush1.bf16.xpose.msra.mxu0 0
        %668 = vmatprep.subr.bf16.mxu0 0
        %669 = vmatpush1.bf16.xpose.msra.mxu0 0
        %670 = vmatprep.subr.bf16.mxu0 0
        %671 = vmatpush1.bf16.xpose.msra.mxu0 0
        %672 = vmatprep.subr.bf16.mxu0 0
        %673 = vmatpush1.bf16.xpose.msra.mxu0 0
        %674 = vmatprep.subr.bf16.mxu0 0
        %675 = vmatpush1.bf16.xpose.msra.mxu0 0
        %676 = vmatprep.subr.bf16.mxu0 0
        %677 = vmatpush1.bf16.xpose.msra.mxu0 0
        %678 = vmatprep.subr.bf16.mxu0 0
        %679 = vmatpush1.bf16.xpose.msra.mxu0 0
        %680 = vmatprep.subr.bf16.mxu0 0
        %681 = vmatpush1.bf16.xpose.msra.mxu0 0
        %682 = vmatprep.mubr.bf16.mxu0 0
        %683 = vmatmul.mubr.bf16.gmra.mrb[0].mxu0 %v647
        %v684 = vpop.f32.mrb[0].mxu0
        %v685 = vadd.f32 0.0, %v684
        %v686 = vpop.f32.mrb[0].mxu0
        %v687 = vpop.f32.mrb[0].mxu0
        %v688 = vpop.f32.mrb[0].mxu0
        %689 = vdwg.mxu0
        %v690 = vmul.f32 %v685, 0.25
        %v691 = vsel %vm541, %v690, -1e+30
        %v692 = vsel %vm587, %v691, -inf
        %693 = vmax.xlane.f32.xlu0 %v692
        %v694 = vpop.xlane.xlu0 %693
        %v695 = vsub.f32 %v691, %v694
        %v696 = vmul.f32 %v695, 1.442695
        %v697 = vpow.pop %v696
        %v698 = vsel %vm587, %v697, 0.0
        %699 = vadd.xlane.f32.xlu0 %v698
        %v700 = vpop.xlane.xlu0 %699
        %v701 = vrcp.pop %v700
        %v702 = vmul.f32 %v697, %v701
        %v703 = vpack.c.bf16 %v702, %v702
        %v705 = vsel %vm587, %v703, 0
        %v708 = vsel %vm603, %v649, 0
        %710 = vmatprep.subr.bf16.mxu0 0
        %711 = vmatpush1.bf16.msra.mxu0 %v708
        %712 = vmatprep.subr.bf16.mxu0 0
        %713 = vmatpush1.bf16.msra.mxu0 0
        %714 = vmatprep.subr.bf16.mxu0 0
        %715 = vmatpush1.bf16.msra.mxu0 0
        %716 = vmatprep.subr.bf16.mxu0 0
        %717 = vmatpush1.bf16.msra.mxu0 0
        %718 = vmatprep.subr.bf16.mxu0 0
        %719 = vmatpush1.bf16.msra.mxu0 0
        %720 = vmatprep.subr.bf16.mxu0 0
        %721 = vmatpush1.bf16.msra.mxu0 0
        %722 = vmatprep.subr.bf16.mxu0 0
        %723 = vmatpush1.bf16.msra.mxu0 0
        %724 = vmatprep.subr.bf16.mxu0 0
        %725 = vmatpush1.bf16.msra.mxu0 0
        %726 = vmatprep.subr.bf16.mxu0 0
        %727 = vmatpush1.bf16.msra.mxu0 0
        %728 = vmatprep.subr.bf16.mxu0 0
        %729 = vmatpush1.bf16.msra.mxu0 0
        %730 = vmatprep.subr.bf16.mxu0 0
        %731 = vmatpush1.bf16.msra.mxu0 0
        %732 = vmatprep.subr.bf16.mxu0 0
        %733 = vmatpush1.bf16.msra.mxu0 0
        %734 = vmatprep.subr.bf16.mxu0 0
        %735 = vmatpush1.bf16.msra.mxu0 0
        %736 = vmatprep.subr.bf16.mxu0 0
        %737 = vmatpush1.bf16.msra.mxu0 0
        %738 = vmatprep.subr.bf16.mxu0 0
        %739 = vmatpush1.bf16.msra.mxu0 0
        %740 = vmatprep.subr.bf16.mxu0 0
        %741 = vmatpush1.bf16.msra.mxu0 0
        %742 = vmatprep.mubr.bf16.mxu0 0
        %743 = vmatmul.mubr.bf16.gmra.mrb[0].mxu0 %v705
        %v744 = vpop.f32.mrb[0].mxu0
        %v745 = vadd.f32 0.0, %v744
        %v746 = vpop.f32.mrb[0].mxu0
        %v747 = vpop.f32.mrb[0].mxu0
        %v748 = vpop.f32.mrb[0].mxu0
        %749 = vdwg.mxu0
        %v750 = vpack.c.bf16 %v642, %v642
        %v751 = vpack.c.bf16 %v745, %v745
        %v752 = vld [vmem:[%s3] sm:$0xf]
        %v753 = vld [vmem:[%s3 + $0x4] sm:$0xf]
        %v754 = vld [vmem:[%s3 + $0x8] sm:$0xf]
        %v755 = vld [vmem:[%s3 + $0xc] sm:$0xf]
        %v756 = vld [vmem:[%s3 + $0x10] sm:$0xf]
        %v757 = vld [vmem:[%s3 + $0x14] sm:$0xf]
        %v758 = vld [vmem:[%s3 + $0x18] sm:$0xf]
        %v759 = vld [vmem:[%s3 + $0x1c] sm:$0xf]
        %v760 = vld [vmem:[%s3 + $0x20] sm:$0xf]
        %v761 = vld [vmem:[%s3 + $0x24] sm:$0xf]
        %v762 = vld [vmem:[%s3 + $0x28] sm:$0xf]
        %v763 = vld [vmem:[%s3 + $0x2c] sm:$0xf]
        %v764 = vld [vmem:[%s3 + $0x30] sm:$0xf]
        %v765 = vld [vmem:[%s3 + $0x34] sm:$0xf]
        %v766 = vld [vmem:[%s3 + $0x38] sm:$0xf]
        %v767 = vld [vmem:[%s3 + $0x3c] sm:$0xf]
        %v768 = vld [vmem:[%s3 + $0x40] sm:$0xf]
        %v769 = vld [vmem:[%s3 + $0x44] sm:$0xf]
        %v770 = vld [vmem:[%s3 + $0x48] sm:$0xf]
        %v771 = vld [vmem:[%s3 + $0x4c] sm:$0xf]
        %v772 = vld [vmem:[%s3 + $0x50] sm:$0xf]
        %v773 = vld [vmem:[%s3 + $0x54] sm:$0xf]
        %v774 = vld [vmem:[%s3 + $0x58] sm:$0xf]
        %v775 = vld [vmem:[%s3 + $0x5c] sm:$0xf]
        %v776 = vld [vmem:[%s3 + $0x60] sm:$0xf]
        %v777 = vld [vmem:[%s3 + $0x64] sm:$0xf]
        %v778 = vld [vmem:[%s3 + $0x68] sm:$0xf]
        %v779 = vld [vmem:[%s3 + $0x6c] sm:$0xf]
        %v780 = vld [vmem:[%s3 + $0x70] sm:$0xf]
        %v781 = vld [vmem:[%s3 + $0x74] sm:$0xf]
        %v782 = vld [vmem:[%s3 + $0x78] sm:$0xf]
        %v783 = vld [vmem:[%s3 + $0x7c] sm:$0xf]
        %v784 = vld [vmem:[%s1 + $0x6] sm:$0x1]
        %v786 = vlaneseq
        %v787 = vshrl.u32 %v786, 7
        %v788 = vsub.s32 0, %v787
        %v789 = vrot.slane %v784, %v788
        %v823 = vunpack.c.l.b16 %v752
        %v824 = vunpack.c.l.b16 %v753
        %v825 = vunpack.c.l.b16 %v754
        %v826 = vunpack.c.l.b16 %v755
        %v827 = vunpack.c.l.b16 %v756
        %v828 = vunpack.c.l.b16 %v757
        %v829 = vunpack.c.l.b16 %v758
        %v830 = vunpack.c.l.b16 %v759
        %v831 = vunpack.c.l.b16 %v760
        %v832 = vunpack.c.l.b16 %v761
        %v833 = vunpack.c.l.b16 %v762
        %v834 = vunpack.c.l.b16 %v763
        %v835 = vunpack.c.l.b16 %v764
        %v836 = vunpack.c.l.b16 %v765
        %v837 = vunpack.c.l.b16 %v766
        %v838 = vunpack.c.l.b16 %v767
        %v839 = vunpack.c.l.b16 %v768
        %v840 = vunpack.c.l.b16 %v769
        %v841 = vunpack.c.l.b16 %v770
        %v842 = vunpack.c.l.b16 %v771
        %v843 = vunpack.c.l.b16 %v772
        %v844 = vunpack.c.l.b16 %v773
        %v845 = vunpack.c.l.b16 %v774
        %v846 = vunpack.c.l.b16 %v775
        %v847 = vunpack.c.l.b16 %v776
        %v848 = vunpack.c.l.b16 %v777
        %v849 = vunpack.c.l.b16 %v778
        %v850 = vunpack.c.l.b16 %v779
        %v851 = vunpack.c.l.b16 %v780
        %v852 = vunpack.c.l.b16 %v781
        %v853 = vunpack.c.l.b16 %v782
        %v854 = vunpack.c.l.b16 %v783
        %v855 = vpack.c.b16 %v824, %v823
        %v856 = vpack.c.b16 %v826, %v825
        %v857 = vpack.c.b16 %v828, %v827
        %v858 = vpack.c.b16 %v830, %v829
        %v859 = vpack.c.b16 %v832, %v831
        %v860 = vpack.c.b16 %v834, %v833
        %v861 = vpack.c.b16 %v836, %v835
        %v862 = vpack.c.b16 %v838, %v837
        %v863 = vpack.c.b16 %v840, %v839
        %v864 = vpack.c.b16 %v842, %v841
        %v865 = vpack.c.b16 %v844, %v843
        %v866 = vpack.c.b16 %v846, %v845
        %v867 = vpack.c.b16 %v848, %v847
        %v868 = vpack.c.b16 %v850, %v849
        %v869 = vpack.c.b16 %v852, %v851
        %v870 = vpack.c.b16 %v854, %v853
        %887 = vmatprep.subr.bf16.mxu0 0
        %888 = vmatpush1.bf16.msra.mxu0 %v855
        %889 = vmatprep.subr.bf16.mxu0 0
        %890 = vmatpush1.bf16.msra.mxu0 %v856
        %891 = vmatprep.subr.bf16.mxu0 0
        %892 = vmatpush1.bf16.msra.mxu0 %v857
        %893 = vmatprep.subr.bf16.mxu0 0
        %894 = vmatpush1.bf16.msra.mxu0 %v858
        %895 = vmatprep.subr.bf16.mxu0 0
        %896 = vmatpush1.bf16.msra.mxu0 %v859
        %897 = vmatprep.subr.bf16.mxu0 0
        %898 = vmatpush1.bf16.msra.mxu0 %v860
        %899 = vmatprep.subr.bf16.mxu0 0
        %900 = vmatpush1.bf16.msra.mxu0 %v861
        %901 = vmatprep.subr.bf16.mxu0 0
        %902 = vmatpush1.bf16.msra.mxu0 %v862
        %903 = vmatprep.subr.bf16.mxu0 0
        %904 = vmatpush1.bf16.msra.mxu0 %v863
        %905 = vmatprep.subr.bf16.mxu0 0
        %906 = vmatpush1.bf16.msra.mxu0 %v864
        %907 = vmatprep.subr.bf16.mxu0 0
        %908 = vmatpush1.bf16.msra.mxu0 %v865
        %909 = vmatprep.subr.bf16.mxu0 0
        %910 = vmatpush1.bf16.msra.mxu0 %v866
        %911 = vmatprep.subr.bf16.mxu0 0
        %912 = vmatpush1.bf16.msra.mxu0 %v867
        %913 = vmatprep.subr.bf16.mxu0 0
        %914 = vmatpush1.bf16.msra.mxu0 %v868
        %915 = vmatprep.subr.bf16.mxu0 0
        %916 = vmatpush1.bf16.msra.mxu0 %v869
        %917 = vmatprep.subr.bf16.mxu0 0
        %918 = vmatpush1.bf16.msra.mxu0 %v870
        %919 = vmatprep.mubr.bf16.mxu0 %v751
        %920 = vmatmul.mubr.bf16.gmra.mrb[0].mxu0 %v750
        %v921 = vpop.f32.mrb[0].mxu0
        %v922 = vadd.f32 %v789, %v921
        %v923 = vpop.f32.mrb[0].mxu0
        %v924 = vpop.f32.mrb[0].mxu0
        %v925 = vpop.f32.mrb[0].mxu0
        %926 = vdwg.mxu0
        %v927 = vadd.f32 %v274, %v922
        %v928 = vld [vmem:[%s1 + $0x2] sm:$0x1]
        %v929 = vld [vmem:[%s1 + $0x3] sm:$0x1]
        %v930 = vsel %vm277, %v927, 0.0
        %931 = vadd.xlane.f32.xlu0 %v930
        %v932 = vpop.xlane.xlu0 %931
        %v933 = vmul.f32 %v932, %v281
        %v934 = vsub.f32 %v927, %v933
        %v935 = vmul.f32 %v934, %v934
        %v936 = vsel %vm277, %v935, 0.0
        %937 = vadd.xlane.f32.xlu0 %v936
        %v938 = vpop.xlane.xlu0 %937
        %v939 = vmul.f32 %v938, %v281
        %v940 = vadd.f32 %v939, 1e-05
        %v941 = vrsqrt.pop %v940
        %v942 = vmul.f32 %v934, %v941
        %v944 = vlaneseq
        %v945 = vshrl.u32 %v944, 7
        %v946 = vsub.s32 0, %v945
        %v947 = vrot.slane %v928, %v946
        %v949 = vmul.f32 %v942, %v947
        %v951 = vlaneseq
        %v952 = vshrl.u32 %v951, 7
        %v953 = vsub.s32 0, %v952
        %v954 = vrot.slane %v929, %v953
        %v956 = vadd.f32 %v949, %v954
        %v957 = vpack.c.bf16 %v956, %v956
        %v958 = vld [vmem:[%s4] sm:$0xf]
        %v959 = vld [vmem:[%s4 + $0x4] sm:$0xf]
        %v960 = vld [vmem:[%s4 + $0x8] sm:$0xf]
        %v961 = vld [vmem:[%s4 + $0xc] sm:$0xf]
        %v962 = vld [vmem:[%s1 + $0x8] sm:$0x1]
        %v964 = vlaneseq
        %v965 = vshrl.u32 %v964, 7
        %v966 = vsub.s32 0, %v965
        %v967 = vrot.slane %v962, %v966
        %v973 = vunpack.c.l.b16 %v958
        %v974 = vunpack.c.l.b16 %v959
        %v975 = vunpack.c.l.b16 %v960
        %v976 = vunpack.c.l.b16 %v961
        %v977 = vpack.c.b16 %v974, %v973
        %v978 = vpack.c.b16 %v976, %v975
        %v982 = vsel %vm277, %v957, 0
        %984 = vmatprep.subr.bf16.mxu0 0
        %985 = vmatpush1.bf16.msra.mxu0 %v977
        %986 = vmatprep.subr.bf16.mxu0 0
        %987 = vmatpush1.bf16.msra.mxu0 %v978
        %988 = vmatprep.subr.bf16.mxu0 0
        %989 = vmatpush1.bf16.msra.mxu0 0
        %990 = vmatprep.subr.bf16.mxu0 0
        %991 = vmatpush1.bf16.msra.mxu0 0
        %992 = vmatprep.subr.bf16.mxu0 0
        %993 = vmatpush1.bf16.msra.mxu0 0
        %994 = vmatprep.subr.bf16.mxu0 0
        %995 = vmatpush1.bf16.msra.mxu0 0
        %996 = vmatprep.subr.bf16.mxu0 0
        %997 = vmatpush1.bf16.msra.mxu0 0
        %998 = vmatprep.subr.bf16.mxu0 0
        %999 = vmatpush1.bf16.msra.mxu0 0
        %1000 = vmatprep.subr.bf16.mxu0 0
        %1001 = vmatpush1.bf16.msra.mxu0 0
        %1002 = vmatprep.subr.bf16.mxu0 0
        %1003 = vmatpush1.bf16.msra.mxu0 0
        %1004 = vmatprep.subr.bf16.mxu0 0
        %1005 = vmatpush1.bf16.msra.mxu0 0
        %1006 = vmatprep.subr.bf16.mxu0 0
        %1007 = vmatpush1.bf16.msra.mxu0 0
        %1008 = vmatprep.subr.bf16.mxu0 0
        %1009 = vmatpush1.bf16.msra.mxu0 0
        %1010 = vmatprep.subr.bf16.mxu0 0
        %1011 = vmatpush1.bf16.msra.mxu0 0
        %1012 = vmatprep.subr.bf16.mxu0 0
        %1013 = vmatpush1.bf16.msra.mxu0 0
        %1014 = vmatprep.subr.bf16.mxu0 0
        %1015 = vmatpush1.bf16.msra.mxu0 0
        %1016 = vmatprep.mubr.bf16.mxu0 0
        %1017 = vmatmul.mubr.bf16.gmra.mrb[0].mxu0 %v982
        %v1018 = vpop.f32.mrb[0].mxu0
        %v1019 = vadd.f32 %v967, %v1018
        %v1020 = vpop.f32.mrb[0].mxu0
        %v1021 = vpop.f32.mrb[0].mxu0
        %v1022 = vpop.f32.mrb[0].mxu0
        %1023 = vdwg.mxu0
        %v1024 = vmul.f32 %v1019, %v1019
        %v1025 = vmul.f32 %v1019, %v1024
        %v1026 = vmul.f32 %v1025, 0.044715
        %v1027 = vadd.f32 %v1019, %v1026
        %v1028 = vmul.f32 %v1027, 0.7978846
        %v1029 = vtanh.pop %v1028
        %v1030 = vadd.f32 %v1029, 1.0
        %v1031 = vmul.f32 %v1030, 0.5
        %v1032 = vmul.f32 %v1019, %v1031
        %v1033 = vpack.c.bf16 %v1032, %v1032
        %v1034 = vld [vmem:[%s5] sm:$0xf]
        %v1035 = vld [vmem:[%s5 + $0x4] sm:$0xf]
        %v1036 = vld [vmem:[%s5 + $0x8] sm:$0xf]
        %v1037 = vld [vmem:[%s5 + $0xc] sm:$0xf]
        %v1038 = vld [vmem:[%s5 + $0x10] sm:$0xf]
        %v1039 = vld [vmem:[%s5 + $0x14] sm:$0xf]
        %v1040 = vld [vmem:[%s5 + $0x18] sm:$0xf]
        %v1041 = vld [vmem:[%s5 + $0x1c] sm:$0xf]
        %v1042 = vld [vmem:[%s5 + $0x20] sm:$0xf]
        %v1043 = vld [vmem:[%s5 + $0x24] sm:$0xf]
        %v1044 = vld [vmem:[%s5 + $0x28] sm:$0xf]
        %v1045 = vld [vmem:[%s5 + $0x2c] sm:$0xf]
        %v1046 = vld [vmem:[%s5 + $0x30] sm:$0xf]
        %v1047 = vld [vmem:[%s5 + $0x34] sm:$0xf]
        %v1048 = vld [vmem:[%s5 + $0x38] sm:$0xf]
        %v1049 = vld [vmem:[%s5 + $0x3c] sm:$0xf]
        %v1050 = vld [vmem:[%s1 + $0x7] sm:$0x1]
        %v1052 = vlaneseq
        %v1053 = vshrl.u32 %v1052, 7
        %v1054 = vsub.s32 0, %v1053
        %v1055 = vrot.slane %v1050, %v1054
        %v1073 = vunpack.c.l.b16 %v1034
        %v1074 = vunpack.c.l.b16 %v1035
        %v1075 = vunpack.c.l.b16 %v1036
        %v1076 = vunpack.c.l.b16 %v1037
        %v1077 = vunpack.c.l.b16 %v1038
        %v1078 = vunpack.c.l.b16 %v1039
        %v1079 = vunpack.c.l.b16 %v1040
        %v1080 = vunpack.c.l.b16 %v1041
        %v1081 = vunpack.c.l.b16 %v1042
        %v1082 = vunpack.c.l.b16 %v1043
        %v1083 = vunpack.c.l.b16 %v1044
        %v1084 = vunpack.c.l.b16 %v1045
        %v1085 = vunpack.c.l.b16 %v1046
        %v1086 = vunpack.c.l.b16 %v1047
        %v1087 = vunpack.c.l.b16 %v1048
        %v1088 = vunpack.c.l.b16 %v1049
        %v1089 = vpack.c.b16 %v1074, %v1073
        %v1090 = vpack.c.b16 %v1076, %v1075
        %v1091 = vpack.c.b16 %v1078, %v1077
        %v1092 = vpack.c.b16 %v1080, %v1079
        %v1093 = vpack.c.b16 %v1082, %v1081
        %v1094 = vpack.c.b16 %v1084, %v1083
        %v1095 = vpack.c.b16 %v1086, %v1085
        %v1096 = vpack.c.b16 %v1088, %v1087
        %1105 = vmatprep.subr.bf16.mxu0 0
        %1106 = vmatpush1.bf16.msra.mxu0 %v1089
        %1107 = vmatprep.subr.bf16.mxu0 0
        %1108 = vmatpush1.bf16.msra.mxu0 %v1090
        %1109 = vmatprep.subr.bf16.mxu0 0
        %1110 = vmatpush1.bf16.msra.mxu0 %v1091
        %1111 = vmatprep.subr.bf16.mxu0 0
        %1112 = vmatpush1.bf16.msra.mxu0 %v1092
        %1113 = vmatprep.subr.bf16.mxu0 0
        %1114 = vmatpush1.bf16.msra.mxu0 %v1093
        %1115 = vmatprep.subr.bf16.mxu0 0
        %1116 = vmatpush1.bf16.msra.mxu0 %v1094
        %1117 = vmatprep.subr.bf16.mxu0 0
        %1118 = vmatpush1.bf16.msra.mxu0 %v1095
        %1119 = vmatprep.subr.bf16.mxu0 0
        %1120 = vmatpush1.bf16.msra.mxu0 %v1096
        %1121 = vmatprep.subr.bf16.mxu0 0
        %1122 = vmatpush1.bf16.msra.mxu0 0
        %1123 = vmatprep.subr.bf16.mxu0 0
        %1124 = vmatpush1.bf16.msra.mxu0 0
        %1125 = vmatprep.subr.bf16.mxu0 0
        %1126 = vmatpush1.bf16.msra.mxu0 0
        %1127 = vmatprep.subr.bf16.mxu0 0
        %1128 = vmatpush1.bf16.msra.mxu0 0
        %1129 = vmatprep.subr.bf16.mxu0 0
        %1130 = vmatpush1.bf16.msra.mxu0 0
        %1131 = vmatprep.subr.bf16.mxu0 0
        %1132 = vmatpush1.bf16.msra.mxu0 0
        %1133 = vmatprep.subr.bf16.mxu0 0
        %1134 = vmatpush1.bf16.msra.mxu0 0
        %1135 = vmatprep.subr.bf16.mxu0 0
        %1136 = vmatpush1.bf16.msra.mxu0 0
        %1137 = vmatprep.mubr.bf16.mxu0 0
        %1138 = vmatmul.mubr.bf16.gmra.mrb[0].mxu0 %v1033
        %v1139 = vpop.f32.mrb[0].mxu0
        %v1140 = vadd.f32 %v1055, %v1139
        %v1141 = vpop.f32.mrb[0].mxu0
        %v1142 = vpop.f32.mrb[0].mxu0
        %v1143 = vpop.f32.mrb[0].mxu0
        %1144 = vdwg.mxu0
        %v1145 = vadd.f32 %v927, %v1140
        %v1146 = vld [vmem:[%s1 + $0x4] sm:$0x1]
        %v1147 = vld [vmem:[%s1 + $0x5] sm:$0x1]
        %v1148 = vsel %vm277, %v1145, 0.0
        %1149 = vadd.xlane.f32.xlu0 %v1148
        %v1150 = vpop.xlane.xlu0 %1149
        %v1151 = vmul.f32 %v1150, %v281
        %v1152 = vsub.f32 %v1145, %v1151
        %v1153 = vmul.f32 %v1152, %v1152
        %v1154 = vsel %vm277, %v1153, 0.0
        %1155 = vadd.xlane.f32.xlu0 %v1154
        %v1156 = vpop.xlane.xlu0 %1155
        %v1157 = vmul.f32 %v1156, %v281
        %v1158 = vadd.f32 %v1157, 1e-05
        %v1159 = vrsqrt.pop %v1158
        %v1160 = vmul.f32 %v1152, %v1159
        %v1162 = vlaneseq
        %v1163 = vshrl.u32 %v1162, 7
        %v1164 = vsub.s32 0, %v1163
        %v1165 = vrot.slane %v1146, %v1164
        %v1167 = vmul.f32 %v1160, %v1165
        %v1169 = vlaneseq
        %v1170 = vshrl.u32 %v1169, 7
        %v1171 = vsub.s32 0, %v1170
        %v1172 = vrot.slane %v1147, %v1171
        %v1174 = vadd.f32 %v1167, %v1172
        %v1175 = vpack.c.bf16 %v1174, %v1174
        %v1176 = vld [vmem:[%s1 + $0x9] sm:$0x1]
        %v1177 = vld [vmem:[%s6] sm:$0xf]
        %v1178 = vld [vmem:[%s6 + $0x4] sm:$0xf]
        %v1179 = vld [vmem:[%s6 + $0x8] sm:$0xf]
        %v1180 = vld [vmem:[%s6 + $0xc] sm:$0xf]
        %v1185 = vunpack.c.l.b16 %v1177
        %v1186 = vunpack.c.l.b16 %v1178
        %v1187 = vunpack.c.l.b16 %v1179
        %v1188 = vunpack.c.l.b16 %v1180
        %v1189 = vpack.c.b16 %v1186, %v1185
        %v1190 = vpack.c.b16 %v1188, %v1187
        %v1194 = vsel %vm277, %v1175, 0
        %1196 = vmatprep.subr.bf16.mxu0 0
        %1197 = vmatpush1.bf16.msra.mxu0 %v1189
        %1198 = vmatprep.subr.bf16.mxu0 0
        %1199 = vmatpush1.bf16.msra.mxu0 %v1190
        %1200 = vmatprep.subr.bf16.mxu0 0
        %1201 = vmatpush1.bf16.msra.mxu0 0
        %1202 = vmatprep.subr.bf16.mxu0 0
        %1203 = vmatpush1.bf16.msra.mxu0 0
        %1204 = vmatprep.subr.bf16.mxu0 0
        %1205 = vmatpush1.bf16.msra.mxu0 0
        %1206 = vmatprep.subr.bf16.mxu0 0
        %1207 = vmatpush1.bf16.msra.mxu0 0
        %1208 = vmatprep.subr.bf16.mxu0 0
        %1209 = vmatpush1.bf16.msra.mxu0 0
        %1210 = vmatprep.subr.bf16.mxu0 0
        %1211 = vmatpush1.bf16.msra.mxu0 0
        %1212 = vmatprep.subr.bf16.mxu0 0
        %1213 = vmatpush1.bf16.msra.mxu0 0
        %1214 = vmatprep.subr.bf16.mxu0 0
        %1215 = vmatpush1.bf16.msra.mxu0 0
        %1216 = vmatprep.subr.bf16.mxu0 0
        %1217 = vmatpush1.bf16.msra.mxu0 0
        %1218 = vmatprep.subr.bf16.mxu0 0
        %1219 = vmatpush1.bf16.msra.mxu0 0
        %1220 = vmatprep.subr.bf16.mxu0 0
        %1221 = vmatpush1.bf16.msra.mxu0 0
        %1222 = vmatprep.subr.bf16.mxu0 0
        %1223 = vmatpush1.bf16.msra.mxu0 0
        %1224 = vmatprep.subr.bf16.mxu0 0
        %1225 = vmatpush1.bf16.msra.mxu0 0
        %1226 = vmatprep.subr.bf16.mxu0 0
        %1227 = vmatpush1.bf16.msra.mxu0 0
        %1228 = vmatprep.mubr.bf16.mxu0 0
        %1229 = vmatmul.mubr.bf16.gmra.mrb[0].mxu0 %v1194
        %v1230 = vpop.f32.mrb[0].mxu0
        %v1231 = vadd.f32 0.0, %v1230
        %v1232 = vpop.f32.mrb[0].mxu0
        %v1233 = vpop.f32.mrb[0].mxu0
        %v1234 = vpop.f32.mrb[0].mxu0
        %1235 = vdwg.mxu0
        %v1236 = vadd.f32 %v1176, %v1231
        %s1237 = scalar_lea.vmem %s6, 16
        %v1238 = vld [vmem:[%s1237] sm:$0xf]
        %v1239 = vld [vmem:[%s1237 + $0x4] sm:$0xf]
        %v1240 = vld [vmem:[%s1237 + $0x8] sm:$0xf]
        %v1241 = vld [vmem:[%s1237 + $0xc] sm:$0xf]
        %v1242 = vshrl.u32 %v1175, 16
        %v1248 = vunpack.c.l.b16 %v1238
        %v1249 = vunpack.c.l.b16 %v1239
        %v1250 = vunpack.c.l.b16 %v1240
        %v1251 = vunpack.c.l.b16 %v1241
        %v1252 = vpack.c.b16 %v1249, %v1248
        %v1253 = vpack.c.b16 %v1251, %v1250
        %v1257 = vsel %vm277, %v1242, 0
        %1259 = vmatprep.subr.bf16.mxu0 0
        %1260 = vmatpush1.bf16.msra.mxu0 %v1252
        %1261 = vmatprep.subr.bf16.mxu0 0
        %1262 = vmatpush1.bf16.msra.mxu0 %v1253
        %1263 = vmatprep.subr.bf16.mxu0 0
        %1264 = vmatpush1.bf16.msra.mxu0 0
        %1265 = vmatprep.subr.bf16.mxu0 0
        %1266 = vmatpush1.bf16.msra.mxu0 0
        %1267 = vmatprep.subr.bf16.mxu0 0
        %1268 = vmatpush1.bf16.msra.mxu0 0
        %1269 = vmatprep.subr.bf16.mxu0 0
        %1270 = vmatpush1.bf16.msra.mxu0 0
        %1271 = vmatprep.subr.bf16.mxu0 0
        %1272 = vmatpush1.bf16.msra.mxu0 0
        %1273 = vmatprep.subr.bf16.mxu0 0
        %1274 = vmatpush1.bf16.msra.mxu0 0
        %1275 = vmatprep.subr.bf16.mxu0 0
        %1276 = vmatpush1.bf16.msra.mxu0 0
        %1277 = vmatprep.subr.bf16.mxu0 0
        %1278 = vmatpush1.bf16.msra.mxu0 0
        %1279 = vmatprep.subr.bf16.mxu0 0
        %1280 = vmatpush1.bf16.msra.mxu0 0
        %1281 = vmatprep.subr.bf16.mxu0 0
        %1282 = vmatpush1.bf16.msra.mxu0 0
        %1283 = vmatprep.subr.bf16.mxu0 0
        %1284 = vmatpush1.bf16.msra.mxu0 0
        %1285 = vmatprep.subr.bf16.mxu0 0
        %1286 = vmatpush1.bf16.msra.mxu0 0
        %1287 = vmatprep.subr.bf16.mxu0 0
        %1288 = vmatpush1.bf16.msra.mxu0 0
        %1289 = vmatprep.subr.bf16.mxu0 0
        %1290 = vmatpush1.bf16.msra.mxu0 0
        %1291 = vmatprep.mubr.bf16.mxu0 0
        %1292 = vmatmul.mubr.bf16.gmra.mrb[0].mxu0 %v1257
        %v1293 = vpop.f32.mrb[0].mxu0
        %v1294 = vadd.f32 0.0, %v1293
        %v1295 = vpop.f32.mrb[0].mxu0
        %v1296 = vpop.f32.mrb[0].mxu0
        %v1297 = vpop.f32.mrb[0].mxu0
        %1298 = vdwg.mxu0
        %v1299 = vadd.f32 %v1236, %v1294
        %s1300 = scalar_lea.vmem %s6, 32
        %v1301 = vld [vmem:[%s1300] sm:$0xf]
        %v1302 = vld [vmem:[%s1300 + $0x4] sm:$0xf]
        %v1303 = vld [vmem:[%s1300 + $0x8] sm:$0xf]
        %v1304 = vld [vmem:[%s1300 + $0xc] sm:$0xf]
        %v1306 = vrot.slane %v1175, 1
        %v1311 = vunpack.c.l.b16 %v1301
        %v1312 = vunpack.c.l.b16 %v1302
        %v1313 = vunpack.c.l.b16 %v1303
        %v1314 = vunpack.c.l.b16 %v1304
        %v1315 = vpack.c.b16 %v1312, %v1311
        %v1316 = vpack.c.b16 %v1314, %v1313
        %v1320 = vsel %vm277, %v1306, 0
        %1322 = vmatprep.subr.bf16.mxu0 0
        %1323 = vmatpush1.bf16.msra.mxu0 %v1315
        %1324 = vmatprep.subr.bf16.mxu0 0
        %1325 = vmatpush1.bf16.msra.mxu0 %v1316
        %1326 = vmatprep.subr.bf16.mxu0 0
        %1327 = vmatpush1.bf16.msra.mxu0 0
        %1328 = vmatprep.subr.bf16.mxu0 0
        %1329 = vmatpush1.bf16.msra.mxu0 0
        %1330 = vmatprep.subr.bf16.mxu0 0
        %1331 = vmatpush1.bf16.msra.mxu0 0
        %1332 = vmatprep.subr.bf16.mxu0 0
        %1333 = vmatpush1.bf16.msra.mxu0 0
        %1334 = vmatprep.subr.bf16.mxu0 0
        %1335 = vmatpush1.bf16.msra.mxu0 0
        %1336 = vmatprep.subr.bf16.mxu0 0
        %1337 = vmatpush1.bf16.msra.mxu0 0
        %1338 = vmatprep.subr.bf16.mxu0 0
        %1339 = vmatpush1.bf16.msra.mxu0 0
        %1340 = vmatprep.subr.bf16.mxu0 0
        %1341 = vmatpush1.bf16.msra.mxu0 0
        %1342 = vmatprep.subr.bf16.mxu0 0
        %1343 = vmatpush1.bf16.msra.mxu0 0
        %1344 = vmatprep.subr.bf16.mxu0 0
        %1345 = vmatpush1.bf16.msra.mxu0 0
        %1346 = vmatprep.subr.bf16.mxu0 0
        %1347 = vmatpush1.bf16.msra.mxu0 0
        %1348 = vmatprep.subr.bf16.mxu0 0
        %1349 = vmatpush1.bf16.msra.mxu0 0
        %1350 = vmatprep.subr.bf16.mxu0 0
        %1351 = vmatpush1.bf16.msra.mxu0 0
        %1352 = vmatprep.subr.bf16.mxu0 0
        %1353 = vmatpush1.bf16.msra.mxu0 0
        %1354 = vmatprep.mubr.bf16.mxu0 0
        %1355 = vmatmul.mubr.bf16.gmra.mrb[0].mxu0 %v1320
        %v1356 = vpop.f32.mrb[0].mxu0
        %v1357 = vadd.f32 0.0, %v1356
        %v1358 = vpop.f32.mrb[0].mxu0
        %v1359 = vpop.f32.mrb[0].mxu0
        %v1360 = vpop.f32.mrb[0].mxu0
        %1361 = vdwg.mxu0
        %v1362 = vadd.f32 %v1299, %v1357
        %s1363 = scalar_lea.vmem %s6, 48
        %v1364 = vld [vmem:[%s1363] sm:$0xf]
        %v1365 = vld [vmem:[%s1363 + $0x4] sm:$0xf]
        %v1366 = vld [vmem:[%s1363 + $0x8] sm:$0xf]
        %v1367 = vld [vmem:[%s1363 + $0xc] sm:$0xf]
        %v1368 = vrot.slane %v1242, 1
        %v1373 = vunpack.c.l.b16 %v1364
        %v1374 = vunpack.c.l.b16 %v1365
        %v1375 = vunpack.c.l.b16 %v1366
        %v1376 = vunpack.c.l.b16 %v1367
        %v1377 = vpack.c.b16 %v1374, %v1373
        %v1378 = vpack.c.b16 %v1376, %v1375
        %v1382 = vsel %vm277, %v1368, 0
        %1384 = vmatprep.subr.bf16.mxu0 0
        %1385 = vmatpush1.bf16.msra.mxu0 %v1377
        %1386 = vmatprep.subr.bf16.mxu0 0
        %1387 = vmatpush1.bf16.msra.mxu0 %v1378
        %1388 = vmatprep.subr.bf16.mxu0 0
        %1389 = vmatpush1.bf16.msra.mxu0 0
        %1390 = vmatprep.subr.bf16.mxu0 0
        %1391 = vmatpush1.bf16.msra.mxu0 0
        %1392 = vmatprep.subr.bf16.mxu0 0
        %1393 = vmatpush1.bf16.msra.mxu0 0
        %1394 = vmatprep.subr.bf16.mxu0 0
        %1395 = vmatpush1.bf16.msra.mxu0 0
        %1396 = vmatprep.subr.bf16.mxu0 0
        %1397 = vmatpush1.bf16.msra.mxu0 0
        %1398 = vmatprep.subr.bf16.mxu0 0
        %1399 = vmatpush1.bf16.msra.mxu0 0
        %1400 = vmatprep.subr.bf16.mxu0 0
        %1401 = vmatpush1.bf16.msra.mxu0 0
        %1402 = vmatprep.subr.bf16.mxu0 0
        %1403 = vmatpush1.bf16.msra.mxu0 0
        %1404 = vmatprep.subr.bf16.mxu0 0
        %1405 = vmatpush1.bf16.msra.mxu0 0
        %1406 = vmatprep.subr.bf16.mxu0 0
        %1407 = vmatpush1.bf16.msra.mxu0 0
        %1408 = vmatprep.subr.bf16.mxu0 0
        %1409 = vmatpush1.bf16.msra.mxu0 0
        %1410 = vmatprep.subr.bf16.mxu0 0
        %1411 = vmatpush1.bf16.msra.mxu0 0
        %1412 = vmatprep.subr.bf16.mxu0 0
        %1413 = vmatpush1.bf16.msra.mxu0 0
        %1414 = vmatprep.subr.bf16.mxu0 0
        %1415 = vmatpush1.bf16.msra.mxu0 0
        %1416 = vmatprep.mubr.bf16.mxu0 0
        %1417 = vmatmul.mubr.bf16.gmra.mrb[0].mxu0 %v1382
        %v1418 = vpop.f32.mrb[0].mxu0
        %v1419 = vadd.f32 0.0, %v1418
        %v1420 = vpop.f32.mrb[0].mxu0
        %v1421 = vpop.f32.mrb[0].mxu0
        %v1422 = vpop.f32.mrb[0].mxu0
        %1423 = vdwg.mxu0
        %v1424 = vadd.f32 %v1362, %v1419
        %s1425 = scalar_lea.vmem %s6, 64
        %v1426 = vld [vmem:[%s1425] sm:$0xf]
        %v1427 = vld [vmem:[%s1425 + $0x4] sm:$0xf]
        %v1428 = vld [vmem:[%s1425 + $0x8] sm:$0xf]
        %v1429 = vld [vmem:[%s1425 + $0xc] sm:$0xf]
        %v1430 = vrot.slane %v1175, 2
        %v1435 = vunpack.c.l.b16 %v1426
        %v1436 = vunpack.c.l.b16 %v1427
        %v1437 = vunpack.c.l.b16 %v1428
        %v1438 = vunpack.c.l.b16 %v1429
        %v1439 = vpack.c.b16 %v1436, %v1435
        %v1440 = vpack.c.b16 %v1438, %v1437
        %v1444 = vsel %vm277, %v1430, 0
        %1446 = vmatprep.subr.bf16.mxu0 0
        %1447 = vmatpush1.bf16.msra.mxu0 %v1439
        %1448 = vmatprep.subr.bf16.mxu0 0
        %1449 = vmatpush1.bf16.msra.mxu0 %v1440
        %1450 = vmatprep.subr.bf16.mxu0 0
        %1451 = vmatpush1.bf16.msra.mxu0 0
        %1452 = vmatprep.subr.bf16.mxu0 0
        %1453 = vmatpush1.bf16.msra.mxu0 0
        %1454 = vmatprep.subr.bf16.mxu0 0
        %1455 = vmatpush1.bf16.msra.mxu0 0
        %1456 = vmatprep.subr.bf16.mxu0 0
        %1457 = vmatpush1.bf16.msra.mxu0 0
        %1458 = vmatprep.subr.bf16.mxu0 0
        %1459 = vmatpush1.bf16.msra.mxu0 0
        %1460 = vmatprep.subr.bf16.mxu0 0
        %1461 = vmatpush1.bf16.msra.mxu0 0
        %1462 = vmatprep.subr.bf16.mxu0 0
        %1463 = vmatpush1.bf16.msra.mxu0 0
        %1464 = vmatprep.subr.bf16.mxu0 0
        %1465 = vmatpush1.bf16.msra.mxu0 0
        %1466 = vmatprep.subr.bf16.mxu0 0
        %1467 = vmatpush1.bf16.msra.mxu0 0
        %1468 = vmatprep.subr.bf16.mxu0 0
        %1469 = vmatpush1.bf16.msra.mxu0 0
        %1470 = vmatprep.subr.bf16.mxu0 0
        %1471 = vmatpush1.bf16.msra.mxu0 0
        %1472 = vmatprep.subr.bf16.mxu0 0
        %1473 = vmatpush1.bf16.msra.mxu0 0
        %1474 = vmatprep.subr.bf16.mxu0 0
        %1475 = vmatpush1.bf16.msra.mxu0 0
        %1476 = vmatprep.subr.bf16.mxu0 0
        %1477 = vmatpush1.bf16.msra.mxu0 0
        %1478 = vmatprep.mubr.bf16.mxu0 0
        %1479 = vmatmul.mubr.bf16.gmra.mrb[0].mxu0 %v1444
        %v1480 = vpop.f32.mrb[0].mxu0
        %v1481 = vadd.f32 0.0, %v1480
        %v1482 = vpop.f32.mrb[0].mxu0
        %v1483 = vpop.f32.mrb[0].mxu0
        %v1484 = vpop.f32.mrb[0].mxu0
        %1485 = vdwg.mxu0
        %v1486 = vadd.f32 %v1424, %v1481
        %s1487 = scalar_lea.vmem %s6, 80
        %v1488 = vld [vmem:[%s1487] sm:$0xf]
        %v1489 = vld [vmem:[%s1487 + $0x4] sm:$0xf]
        %v1490 = vld [vmem:[%s1487 + $0x8] sm:$0xf]
        %v1491 = vld [vmem:[%s1487 + $0xc] sm:$0xf]
        %v1492 = vrot.slane %v1242, 2
        %v1497 = vunpack.c.l.b16 %v1488
        %v1498 = vunpack.c.l.b16 %v1489
        %v1499 = vunpack.c.l.b16 %v1490
        %v1500 = vunpack.c.l.b16 %v1491
        %v1501 = vpack.c.b16 %v1498, %v1497
        %v1502 = vpack.c.b16 %v1500, %v1499
        %v1506 = vsel %vm277, %v1492, 0
        %1508 = vmatprep.subr.bf16.mxu0 0
        %1509 = vmatpush1.bf16.msra.mxu0 %v1501
        %1510 = vmatprep.subr.bf16.mxu0 0
        %1511 = vmatpush1.bf16.msra.mxu0 %v1502
        %1512 = vmatprep.subr.bf16.mxu0 0
        %1513 = vmatpush1.bf16.msra.mxu0 0
        %1514 = vmatprep.subr.bf16.mxu0 0
        %1515 = vmatpush1.bf16.msra.mxu0 0
        %1516 = vmatprep.subr.bf16.mxu0 0
        %1517 = vmatpush1.bf16.msra.mxu0 0
        %1518 = vmatprep.subr.bf16.mxu0 0
        %1519 = vmatpush1.bf16.msra.mxu0 0
        %1520 = vmatprep.subr.bf16.mxu0 0
        %1521 = vmatpush1.bf16.msra.mxu0 0
        %1522 = vmatprep.subr.bf16.mxu0 0
        %1523 = vmatpush1.bf16.msra.mxu0 0
        %1524 = vmatprep.subr.bf16.mxu0 0
        %1525 = vmatpush1.bf16.msra.mxu0 0
        %1526 = vmatprep.subr.bf16.mxu0 0
        %1527 = vmatpush1.bf16.msra.mxu0 0
        %1528 = vmatprep.subr.bf16.mxu0 0
        %1529 = vmatpush1.bf16.msra.mxu0 0
        %1530 = vmatprep.subr.bf16.mxu0 0
        %1531 = vmatpush1.bf16.msra.mxu0 0
        %1532 = vmatprep.subr.bf16.mxu0 0
        %1533 = vmatpush1.bf16.msra.mxu0 0
        %1534 = vmatprep.subr.bf16.mxu0 0
        %1535 = vmatpush1.bf16.msra.mxu0 0
        %1536 = vmatprep.subr.bf16.mxu0 0
        %1537 = vmatpush1.bf16.msra.mxu0 0
        %1538 = vmatprep.subr.bf16.mxu0 0
        %1539 = vmatpush1.bf16.msra.mxu0 0
        %1540 = vmatprep.mubr.bf16.mxu0 0
        %1541 = vmatmul.mubr.bf16.gmra.mrb[0].mxu0 %v1506
        %v1542 = vpop.f32.mrb[0].mxu0
        %v1543 = vadd.f32 0.0, %v1542
        %v1544 = vpop.f32.mrb[0].mxu0
        %v1545 = vpop.f32.mrb[0].mxu0
        %v1546 = vpop.f32.mrb[0].mxu0
        %1547 = vdwg.mxu0
        %v1548 = vadd.f32 %v1486, %v1543
        %s1549 = scalar_lea.vmem %s6, 96
        %v1550 = vld [vmem:[%s1549] sm:$0xf]
        %v1551 = vld [vmem:[%s1549 + $0x4] sm:$0xf]
        %v1552 = vld [vmem:[%s1549 + $0x8] sm:$0xf]
        %v1553 = vld [vmem:[%s1549 + $0xc] sm:$0xf]
        %v1554 = vrot.slane %v1175, 3
        %v1559 = vunpack.c.l.b16 %v1550
        %v1560 = vunpack.c.l.b16 %v1551
        %v1561 = vunpack.c.l.b16 %v1552
        %v1562 = vunpack.c.l.b16 %v1553
        %v1563 = vpack.c.b16 %v1560, %v1559
        %v1564 = vpack.c.b16 %v1562, %v1561
        %v1568 = vsel %vm277, %v1554, 0
        %1570 = vmatprep.subr.bf16.mxu0 0
        %1571 = vmatpush1.bf16.msra.mxu0 %v1563
        %1572 = vmatprep.subr.bf16.mxu0 0
        %1573 = vmatpush1.bf16.msra.mxu0 %v1564
        %1574 = vmatprep.subr.bf16.mxu0 0
        %1575 = vmatpush1.bf16.msra.mxu0 0
        %1576 = vmatprep.subr.bf16.mxu0 0
        %1577 = vmatpush1.bf16.msra.mxu0 0
        %1578 = vmatprep.subr.bf16.mxu0 0
        %1579 = vmatpush1.bf16.msra.mxu0 0
        %1580 = vmatprep.subr.bf16.mxu0 0
        %1581 = vmatpush1.bf16.msra.mxu0 0
        %1582 = vmatprep.subr.bf16.mxu0 0
        %1583 = vmatpush1.bf16.msra.mxu0 0
        %1584 = vmatprep.subr.bf16.mxu0 0
        %1585 = vmatpush1.bf16.msra.mxu0 0
        %1586 = vmatprep.subr.bf16.mxu0 0
        %1587 = vmatpush1.bf16.msra.mxu0 0
        %1588 = vmatprep.subr.bf16.mxu0 0
        %1589 = vmatpush1.bf16.msra.mxu0 0
        %1590 = vmatprep.subr.bf16.mxu0 0
        %1591 = vmatpush1.bf16.msra.mxu0 0
        %1592 = vmatprep.subr.bf16.mxu0 0
        %1593 = vmatpush1.bf16.msra.mxu0 0
        %1594 = vmatprep.subr.bf16.mxu0 0
        %1595 = vmatpush1.bf16.msra.mxu0 0
        %1596 = vmatprep.subr.bf16.mxu0 0
        %1597 = vmatpush1.bf16.msra.mxu0 0
        %1598 = vmatprep.subr.bf16.mxu0 0
        %1599 = vmatpush1.bf16.msra.mxu0 0
        %1600 = vmatprep.subr.bf16.mxu0 0
        %1601 = vmatpush1.bf16.msra.mxu0 0
        %1602 = vmatprep.mubr.bf16.mxu0 0
        %1603 = vmatmul.mubr.bf16.gmra.mrb[0].mxu0 %v1568
        %v1604 = vpop.f32.mrb[0].mxu0
        %v1605 = vadd.f32 0.0, %v1604
        %v1606 = vpop.f32.mrb[0].mxu0
        %v1607 = vpop.f32.mrb[0].mxu0
        %v1608 = vpop.f32.mrb[0].mxu0
        %1609 = vdwg.mxu0
        %v1610 = vadd.f32 %v1548, %v1605
        %s1611 = scalar_lea.vmem %s6, 112
        %v1612 = vld [vmem:[%s1611] sm:$0xf]
        %v1613 = vld [vmem:[%s1611 + $0x4] sm:$0xf]
        %v1614 = vld [vmem:[%s1611 + $0x8] sm:$0xf]
        %v1615 = vld [vmem:[%s1611 + $0xc] sm:$0xf]
        %v1616 = vrot.slane %v1242, 3
        %v1621 = vunpack.c.l.b16 %v1612
        %v1622 = vunpack.c.l.b16 %v1613
        %v1623 = vunpack.c.l.b16 %v1614
        %v1624 = vunpack.c.l.b16 %v1615
        %v1625 = vpack.c.b16 %v1622, %v1621
        %v1626 = vpack.c.b16 %v1624, %v1623
        %v1630 = vsel %vm277, %v1616, 0
        %1632 = vmatprep.subr.bf16.mxu0 0
        %1633 = vmatpush1.bf16.msra.mxu0 %v1625
        %1634 = vmatprep.subr.bf16.mxu0 0
        %1635 = vmatpush1.bf16.msra.mxu0 %v1626
        %1636 = vmatprep.subr.bf16.mxu0 0
        %1637 = vmatpush1.bf16.msra.mxu0 0
        %1638 = vmatprep.subr.bf16.mxu0 0
        %1639 = vmatpush1.bf16.msra.mxu0 0
        %1640 = vmatprep.subr.bf16.mxu0 0
        %1641 = vmatpush1.bf16.msra.mxu0 0
        %1642 = vmatprep.subr.bf16.mxu0 0
        %1643 = vmatpush1.bf16.msra.mxu0 0
        %1644 = vmatprep.subr.bf16.mxu0 0
        %1645 = vmatpush1.bf16.msra.mxu0 0
        %1646 = vmatprep.subr.bf16.mxu0 0
        %1647 = vmatpush1.bf16.msra.mxu0 0
        %1648 = vmatprep.subr.bf16.mxu0 0
        %1649 = vmatpush1.bf16.msra.mxu0 0
        %1650 = vmatprep.subr.bf16.mxu0 0
        %1651 = vmatpush1.bf16.msra.mxu0 0
        %1652 = vmatprep.subr.bf16.mxu0 0
        %1653 = vmatpush1.bf16.msra.mxu0 0
        %1654 = vmatprep.subr.bf16.mxu0 0
        %1655 = vmatpush1.bf16.msra.mxu0 0
        %1656 = vmatprep.subr.bf16.mxu0 0
        %1657 = vmatpush1.bf16.msra.mxu0 0
        %1658 = vmatprep.subr.bf16.mxu0 0
        %1659 = vmatpush1.bf16.msra.mxu0 0
        %1660 = vmatprep.subr.bf16.mxu0 0
        %1661 = vmatpush1.bf16.msra.mxu0 0
        %1662 = vmatprep.subr.bf16.mxu0 0
        %1663 = vmatpush1.bf16.msra.mxu0 0
        %1664 = vmatprep.mubr.bf16.mxu0 0
        %1665 = vmatmul.mubr.bf16.gmra.mrb[0].mxu0 %v1630
        %v1666 = vpop.f32.mrb[0].mxu0
        %v1667 = vadd.f32 0.0, %v1666
        %v1668 = vpop.f32.mrb[0].mxu0
        %v1669 = vpop.f32.mrb[0].mxu0
        %v1670 = vpop.f32.mrb[0].mxu0
        %1671 = vdwg.mxu0
        %v1672 = vadd.f32 %v1610, %v1667
        %1673 = vst [vmem:[%s268] sm:$0x1] %v1672
        %s1674 = sand.u32 %s181, 1
        %s1675 = scalar_lea.sflag [#allocation3], %s1674
        %s1676 = sand.u32 %s181, 1
        %s1677 = scalar_lea.vmem [#allocation2], %s1676
        // Predicated region
        $region49: #{prompt_generator_forward.1} parent=47 // pred_check
          %p1678 = pneg %p191
        $region50: #{prompt_generator_forward.1} parent=47 // pred_check_branch
          %1680 = sbr.rel (%p1678) target = $region52
        $region51: #{prompt_generator_forward.1} parent=47 // pred_region
          %s1682 = ssub.s32 16, 16
          %1683 = vsyncadd %s1675, %s1682
          %s1684 = smul.addr %s21, 16
          %s1685 = scalar_lea.hbm %s7, %s1684
          %s1687 = sshll.u32 %s1677, 4
          %s1688 = int_to_ptr.vmem [resolvable:$true] %s1687
          %1690 = dma.vmem_to_hbm [thread:$0]  %s1688, 16, %s1685, %s1675
        $region52: #{prompt_generator_forward.1} parent=47 // pred_fallthru
          _
      $region48: #{prompt_generator_forward.1} parent=5 // pred_fallthru
        _
      %p1691 = scmp.le.s32.totalorder 2, %s16
      // Predicated region
      $region53: #{prompt_generator_forward.1} parent=5 // pred_check
        %p1692 = pneg %p1691
      $region54: #{prompt_generator_forward.1} parent=5 // pred_check_branch
        %1694 = sbr.rel (%p1692) target = $region56
      $region55: #{prompt_generator_forward.1} parent=5 // pred_region
        %s1695 = ssub.s32 %s16, 2
        // Predicated region
        $region57: #{prompt_generator_forward.1} parent=55 // pred_check
          %p1696 = pneg %p197
        $region58: #{prompt_generator_forward.1} parent=55 // pred_check_branch
          %1698 = sbr.rel (%p1696) target = $region60
        $region59: #{prompt_generator_forward.1} parent=55 // pred_region
          %s1699 = sand.u32 %s182, 1
          %s1700 = scalar_lea.sflag [#allocation3], %s1699
          %s1701 = sand.u32 %s182, 1
          %s1702 = scalar_lea.vmem [#allocation2], %s1701
          %1703 = dma.done %s1700, 16
        $region60: #{prompt_generator_forward.1} parent=55 // pred_fallthru
          _
      $region56: #{prompt_generator_forward.1} parent=5 // pred_fallthru
        _
    $region6: #{prompt_generator_forward.1} parent=1 // loop_footer
      %s20 = sadd.s32 1, %s16
    $region7: #{prompt_generator_forward.1} parent=1 // loop_footer_branch
      %15 = sbr.rel target = $region3
    $region8: #{prompt_generator_forward.1} parent=1 // loop_exit
      _
    %1704 = vsyncpa [#allocation3], 1
    %s1705 = scalar_lea.sflag [#allocation3], 1
    %1706 = vsyncpa %s1705, 1

</llo_original>
